<compile_context>
chip_gen: v5e
topology: v5e:2x2
jax: 0.10.0
libtpu: 0.0.40
codegen_flags: <defaults>
</compile_context>

<pallas_src>
import numpy as np
import jax
import jax.numpy as jnp
from jax.experimental import pallas as pl
from jax.experimental.pallas import tpu as pltpu

# ----------------------- deterministic "config.losses" ----------------------
RECONSTRUCTION_LOSS = "l2"
RECONSTRUCTION_WEIGHT = 1.0
QUANTIZER_WEIGHT = 1.0
EDGE_WEIGHT_CFG = RECONSTRUCTION_WEIGHT * 0.2
DISCRIMINATOR_START = 0
DISCRIMINATOR_FACTOR = 1.0
LECAM_REG_WEIGHT = 0.01
LECAM_EMA_DECAY = 0.999

PAD = 2  # zero halo rows/cols, >= radius of the 5x5 conv
_GRAY = (0.2989, 0.587, 0.114)


def _separable_edge_kernels():
    """1-D Gaussian / Sobel factors of compute_edge_maps' rank-1 2D kernels."""
    seps = []
    for size, weight in zip([3, 5], [1.0, 0.5]):
        center = size // 2
        sigma = size / 3.0
        x = np.arange(size, dtype=np.float64) - center
        g = np.exp(-x ** 2 / (2.0 * sigma ** 2))
        g = g / g.sum()
        s = np.arange(-(size // 2), size // 2 + 1, dtype=np.float64)
        s = s / np.abs(s).max()
        seps.append((tuple(float(v) for v in g),
                     tuple(float(v) for v in s),
                     float(weight)))
    return seps


_SEPS = _separable_edge_kernels()


# ------------------------------- Pallas kernel ------------------------------
def _build_generator_kernel(BC, C, H, W, Wp, NW):
    """One chunk of BC samples per grid step.

    t_ref / r_ref: (BC, C*NW) -- per-channel padded planes flattened row-major
    (Hp*Wp with zero halo) and lane-padded to NW, concatenated along lanes.
    ew_ref: (BC, 1) per-sample edge weight.  mask_ref: (1, NW) valid-interior
    mask.  out_ref: (BC, 2) = [recon_mse, edge_loss] per sample (unweighted).
    """
    inv_hw = 1.0 / float(H * W)
    inv_chw = 1.0 / float(C * H * W)
    g3, s3, w3 = _SEPS[0]
    g5, s5, w5 = _SEPS[1]

    def sh(x, d):
        """sh(x, d)[..., f] = x[..., f + d] via lane rotation (XLU).

        The zero halo + zero lane tail guarantee wrapped lanes never reach a
        valid interior output for the shift chains used here (asserted in the
        wrapper)."""
        if d == 0:
            return x
        return pltpu.roll(x, (-d) % NW, 1)

    def kernel(t_ref, r_ref, ew_ref, mask_ref, out_ref):
        maskf = mask_ref[...]                     # (1, NW) 1.0 on valid interior
        mb = maskf > 0.5
        ew = ew_ref[...]                          # (BC, 1)

        def gray(ref):
            acc = None
            for c in range(C):
                term = _GRAY[c] * ref[:, c * NW:(c + 1) * NW]
                acc = term if acc is None else acc + term
            return acc

        tg = gray(t_ref)                          # (BC, NW) targets grayscale
        rg = gray(r_ref)                          # (BC, NW) recons grayscale

        # --- deduped shifted slabs of tg (blur passes + target box pass) ---
        tg_m1, tg_p1 = sh(tg, -1), sh(tg, 1)
        tg_m2, tg_p2 = sh(tg, -2), sh(tg, 2)
        tg_mW, tg_pW = sh(tg, -Wp), sh(tg, Wp)
        tg_m2W, tg_p2W = sh(tg, -2 * Wp), sh(tg, 2 * Wp)

        # ---- compute_edge_maps(targets): separable Gaussian x Sobel, 2 scales ----
        bh3 = g3[0] * tg_m1 + g3[1] * tg + g3[2] * tg_p1          # horiz blur (3)
        bv3 = g3[0] * tg_mW + g3[1] * tg + g3[2] * tg_pW          # vert  blur (3)
        bh5 = (g5[0] * tg_m2 + g5[1] * tg_m1 + g5[2] * tg
               + g5[3] * tg_p1 + g5[4] * tg_p2)                    # horiz blur (5)
        bv5 = (g5[0] * tg_m2W + g5[1] * tg_mW + g5[2] * tg
               + g5[3] * tg_pW + g5[4] * tg_p2W)                   # vert  blur (5)
        # Sobel second pass (zero center tap skipped)
        gx3 = sh(bh3, Wp) - sh(bh3, -Wp)                           # s3 = [-1,0,1]
        gy3 = sh(bv3, 1) - sh(bv3, -1)
        gx5 = (s5[0] * sh(bh5, -2 * Wp) + s5[1] * sh(bh5, -Wp)
               + s5[3] * sh(bh5, Wp) + s5[4] * sh(bh5, 2 * Wp))
        gy5 = (s5[0] * sh(bv5, -2) + s5[1] * sh(bv5, -1)
               + s5[3] * sh(bv5, 1) + s5[4] * sh(bv5, 2))
        e3 = jnp.sqrt(gx3 * gx3 + gy3 * gy3 + 1e-8)
        e5 = jnp.sqrt(gx5 * gx5 + gy5 * gy5 + 1e-8)
        total_edge = w3 * e3 + w5 * e5

        te = jax.nn.sigmoid((total_edge - 0.1) * 5.0)              # (BC, NW)
        big = 3.0e38
        te_max = jnp.max(jnp.where(mb, te, -big), axis=-1, keepdims=True)
        te_min = jnp.min(jnp.where(mb, te, big), axis=-1, keepdims=True)
        te_n = (te - te_min) * pl.reciprocal(te_max - te_min + 1e-8, approx=False)

        # ---- edge-weighted MSE reconstruction loss ----
        # halo / lane-tail diffs are exactly 0, so an unmasked sum == valid sum.
        scale = 1.0 + te_n * ew                                    # (BC, NW)
        acc = None
        for c in range(C):
            dc = (t_ref[:, c * NW:(c + 1) * NW]
                  - r_ref[:, c * NW:(c + 1) * NW]) * scale
            acc = dc * dc if acc is None else acc + dc * dc
        rl = jnp.sum(acc, axis=-1, keepdims=True) * inv_chw        # (BC, 1)

        # ---- compute_edge_loss: rank-1 box kernels (size-3 term, as in ref) ----
        def box_edges(g, g_m1, g_p1, g_mW, g_pW):
            vbox = g_mW + g + g_pW            # 3-tap vertical box sum
            hbox = g_m1 + g + g_p1            # 3-tap horizontal box sum
            gx2 = sh(vbox, -1) - vbox - sh(vbox, 1)   # ones(3,3), right half -1
            gy2 = sh(hbox, -Wp) - hbox - sh(hbox, Wp)  # its transpose
            return jnp.sqrt(gx2 * gx2 + gy2 * gy2 + 1e-6)

        et = box_edges(tg, tg_m1, tg_p1, tg_mW, tg_pW)             # reuse tg shifts
        er = box_edges(rg, sh(rg, -1), sh(rg, 1), sh(rg, -Wp), sh(rg, Wp))
        dd = et - er
        ad = jnp.abs(dd)
        beta = 0.4
        sl1 = jnp.where(ad < beta, 0.5 * dd * dd * (1.0 / beta), ad - 0.5 * beta)
        per_px = 0.5 * dd * dd + 0.5 * sl1
        el = jnp.sum(per_px * maskf, axis=-1, keepdims=True) * inv_hw * ew

        out_ref[:, 0:1] = rl
        out_ref[:, 1:2] = el

    return kernel


def _per_sample_losses(edge_w, tgt, rec):
    """Per-sample (unweighted) reconstruction MSE and edge loss via one Pallas call."""
    B, C, Hr, Wr = tgt.shape
    # TODO(synk): C == 3 assumed (reference's non-RGB branch uses inputs as gray directly).
    assert C == 3
    Hp, Wp = Hr + 2 * PAD, Wr + 2 * PAD
    N = Hp * Wp
    NW = ((N + 127) // 128) * 128          # lane-dense flat axis (multiple of 128)

    # roll-safety: deepest shift chain reaches +/-(2*Wp + 2) from any valid
    # interior output position; it must stay inside [0, N) (no wrap into data).
    reach = 2 * Wp + 2
    f_min = PAD * Wp + PAD
    f_max = (PAD + Hr - 1) * Wp + PAD + Wr - 1
    assert f_min - reach >= 0 and f_max + reach < N, "roll-shift halo too small"

    Bp = ((B + 7) // 8) * 8                # full-vreg sublane slabs
    BC = 8
    nchunk = Bp // BC

    def flat(x):  # (B,C,Hr,Wr) -> (Bp, C*NW); pad + reshape only (no transpose)
        x = jnp.pad(x, ((0, Bp - B), (0, 0), (PAD, PAD), (PAD, PAD)))
        x = x.reshape(Bp, C, N)
        x = jnp.pad(x, ((0, 0), (0, 0), (0, NW - N)))
        return x.reshape(Bp, C * NW)

    tf = flat(tgt)
    rf = flat(rec)

    m = np.zeros((Hp, Wp), np.float32)
    m[PAD:PAD + Hr, PAD:PAD + Wr] = 1.0
    mask = jnp.asarray(np.pad(m.reshape(1, N), ((0, 0), (0, NW - N))))

    ew = jnp.pad(edge_w.reshape(B, 1).astype(jnp.float32), ((0, Bp - B), (0, 0)))

    kernel = _build_generator_kernel(BC, C, Hr, Wr, Wp, NW)
    out = pl.pallas_call(
        kernel,
        grid=(nchunk,),
        in_specs=[
            pl.BlockSpec((BC, C * NW), lambda i: (i, 0)),   # targets
            pl.BlockSpec((BC, C * NW), lambda i: (i, 0)),   # reconstructions
            pl.BlockSpec((BC, 1), lambda i: (i, 0)),        # per-sample edge weight
            pl.BlockSpec((1, NW), lambda i: (0, 0)),        # valid-pixel mask
        ],
        out_specs=pl.BlockSpec((BC, 2), lambda i: (i, 0)),
        out_shape=jax.ShapeDtypeStruct((Bp, 2), jnp.float32),
        compiler_params=pltpu.CompilerParams(
            dimension_semantics=("parallel",)),   # v7x: chunks across both TCs
    )(tf, rf, ew, mask)
    return out[:B, 0], out[:B, 1]


# ------------------------------ generator mode ------------------------------
def reconstruction_loss_stage2_generator(targets, reconstructions, extra_result_dict, global_step):
    targets = targets.astype(jnp.float32)
    reconstructions = reconstructions.astype(jnp.float32)
    lengths = np.asarray(extra_result_dict["lengths_to_keep"]).astype(np.float64)
    B = int(lengths.shape[0])
    C = int(targets.shape[1])
    Hr, Wr = int(reconstructions.shape[-2]), int(reconstructions.shape[-1])

    sizes, edge_ws = [], []
    for i in range(B):
        l = float(lengths[i])
        sizes.append(max(16, round((l / 32.0) ** 1.5 * 256)))
        edge_ws.append(l / 32.0 * 4.0)

    # bucket samples by resize size so the two bilinear passes run batched
    groups = {}
    for i, s in enumerate(sizes):
        groups.setdefault(s, []).append(i)
    tgt = jnp.zeros((B, C, Hr, Wr), jnp.float32)
    for s, idxs in groups.items():
        idx = np.asarray(idxs)
        t = targets[idx]
        # TODO(synk): jax.image.resize(bilinear, antialias=False) ~ F.interpolate
        # (bilinear, align_corners=False); tiny numeric diffs possible on downsample.
        t = jax.image.resize(t, (len(idxs), C, s, s), method="bilinear", antialias=False)
        t = jax.image.resize(t, (len(idxs), C, Hr, Wr), method="bilinear", antialias=False)
        tgt = tgt.at[idx].set(t)

    ew = jnp.asarray(edge_ws, dtype=jnp.float32)
    rl, el = _per_sample_losses(ew, tgt, reconstructions)

    recon_loss = RECONSTRUCTION_WEIGHT * rl          # per-sample
    edge_loss = EDGE_WEIGHT_CFG * el                 # per-sample
    q = QUANTIZER_WEIGHT * extra_result_dict["quantizer_loss"]
    per_sample_total = recon_loss + edge_loss + q
    total_loss = jnp.mean(per_sample_total)

    loss_dict = dict(
        total_loss=total_loss,
        reconstruction_loss=jnp.mean(recon_loss),
        quantizer_loss=q,
        commitment_loss=extra_result_dict["commitment_loss"],
        codebook_loss=extra_result_dict["codebook_loss"],
        gan_loss=jnp.zeros((), jnp.float32),
    )
    return total_loss, loss_dict


# --------------------- discriminator-mode math (hinge+LeCam) ----------------
# TODO(synk): NLayerDiscriminator is not defined in the reference module; this
# kernel consumes externally produced discriminator logits.
def _build_disc_kernel(d_factor):
    def kernel(lr_ref, lf_ref, ema_ref, out_ref):
        lr = lr_ref[...]
        lf = lf_ref[...]
        loss_real = jnp.mean(jnp.maximum(1.0 - lr, 0.0))
        loss_fake = jnp.mean(jnp.maximum(1.0 + lf, 0.0))
        hinge = 0.5 * (loss_real + loss_fake)
        lr_mean = jnp.mean(lr)
        lf_mean = jnp.mean(lf)
        ema_r = ema_ref[0]
        ema_f = ema_ref[1]
        lecam = (jnp.maximum(lr_mean - ema_f, 0.0) ** 2
                 + jnp.maximum(ema_r - lf_mean, 0.0) ** 2)
        lecam_loss = lecam * LECAM_REG_WEIGHT
        out_ref[0] = d_factor * hinge + lecam_loss      # discriminator_loss
        out_ref[1] = lecam_loss
        out_ref[2] = lr_mean
        out_ref[3] = lf_mean
        out_ref[4] = ema_r * LECAM_EMA_DECAY + lr_mean * (1.0 - LECAM_EMA_DECAY)
        out_ref[5] = ema_f * LECAM_EMA_DECAY + lf_mean * (1.0 - LECAM_EMA_DECAY)
    return kernel


def discriminator_loss_from_logits(logits_real, logits_fake, ema, global_step):
    d_factor = DISCRIMINATOR_FACTOR if global_step >= DISCRIMINATOR_START else 0.0
    out = pl.pallas_call(
        _build_disc_kernel(float(d_factor)),
        in_specs=[
            pl.BlockSpec(memory_space=pltpu.MemorySpace.VMEM),
            pl.BlockSpec(memory_space=pltpu.MemorySpace.VMEM),
            pl.BlockSpec(memory_space=pltpu.MemorySpace.SMEM),
        ],
        out_specs=pl.BlockSpec(memory_space=pltpu.MemorySpace.SMEM),
        out_shape=jax.ShapeDtypeStruct((6,), jnp.float32),
    )(logits_real.astype(jnp.float32), logits_fake.astype(jnp.float32),
      ema.astype(jnp.float32))
    d_loss = out[0]
    new_ema = out[4:6]
    loss_dict = dict(discriminator_loss=d_loss, logits_real=out[2],
                     logits_fake=out[3], lecam_loss=out[1])
    return d_loss, loss_dict, new_ema


# ----------------------------------- main ------------------------------------
if __name__ == "__main__":
    key = jax.random.PRNGKey(0)
    k1, k2, k3, k4, k5, k6, k7 = jax.random.split(key, 7)

    B, C, H, W = 2, 3, 16, 16
    targets = jax.random.uniform(k1, (B, C, H, W), jnp.float32)
    reconstructions = jax.random.uniform(k2, (B, C, H, W), jnp.float32)
    lengths_to_keep = jnp.array([2, 4], jnp.int32)
    extra_result_dict = {
        "lengths_to_keep": lengths_to_keep,
        "quantizer_loss": jax.random.uniform(k3, (), jnp.float32),
        "commitment_loss": jax.random.uniform(k4, (), jnp.float32),
        "codebook_loss": jax.random.uniform(k5, (), jnp.float32),
    }

    total_loss, loss_dict = reconstruction_loss_stage2_generator(
        targets, reconstructions, extra_result_dict, global_step=1)
    jax.block_until_ready(total_loss)
    jax.block_until_ready(loss_dict["reconstruction_loss"])

    # discriminator-mode hinge + LeCam math on synthetic logits
    logits_real = jax.random.normal(k6, (B, 256), jnp.float32)
    logits_fake = jax.random.normal(k7, (B, 256), jnp.float32)
    ema = jnp.zeros((2,), jnp.float32)
    d_loss, d_dict, new_ema = discriminator_loss_from_logits(
        logits_real, logits_fake, ema, global_step=100)
    jax.block_until_ready(d_loss)
    jax.block_until_ready(new_ema)

    print("KERNEL_OK")
</pallas_src>

<mosaic_0001>
module attributes {stable_mosaic.version = 11 : i64} {
  func.func @kernel(%arg0: i32, %arg1: memref<8x1536xf32, #tpu.memory_space<vmem>>, %arg2: memref<8x1536xf32, #tpu.memory_space<vmem>>, %arg3: memref<8x1xf32, #tpu.memory_space<vmem>>, %arg4: memref<1x512xf32, #tpu.memory_space<vmem>>, %arg5: memref<8x2xf32, #tpu.memory_space<vmem>>) attributes {dimension_semantics = [#tpu.dimension_semantics<parallel>], iteration_bounds = array<i64: 1>, scalar_prefetch = 0 : i64, scratch_operands = 0 : i64, tpu.core_type = #tpu.core_type<tc>, window_params = [{transform_indices = @transform_0, window_bounds = array<i64: 8, 1536>}, {transform_indices = @transform_1, window_bounds = array<i64: 8, 1536>}, {transform_indices = @transform_2, window_bounds = array<i64: 8, 1>}, {pipeline_mode = #tpu.pipeline_mode<synchronous>, transform_indices = @transform_3, window_bounds = array<i64: 1, 512>}, {transform_indices = @transform_4, window_bounds = array<i64: 8, 2>}]} {
    %c0 = arith.constant 0 : index
    %c0_0 = arith.constant 0 : index
    %0 = vector.load %arg4[%c0, %c0_0] : memref<1x512xf32, #tpu.memory_space<vmem>>, vector<1x512xf32>
    %cst = arith.constant 5.000000e-01 : f32
    %1 = vector.broadcast %cst : f32 to vector<1x512xf32>
    %2 = arith.cmpf ogt, %0, %1 : vector<1x512xf32>
    %c0_1 = arith.constant 0 : index
    %c0_2 = arith.constant 0 : index
    %3 = vector.load %arg3[%c0_1, %c0_2] : memref<8x1xf32, #tpu.memory_space<vmem>>, vector<8x1xf32>
    %c0_3 = arith.constant 0 : index
    %c0_4 = arith.constant 0 : index
    %4 = vector.load %arg1[%c0_3, %c0_4] : memref<8x1536xf32, #tpu.memory_space<vmem>>, vector<8x512xf32>
    %cst_5 = arith.constant 2.989000e-01 : f32
    %5 = vector.broadcast %cst_5 : f32 to vector<8x512xf32>
    %6 = arith.mulf %5, %4 : vector<8x512xf32>
    %c0_6 = arith.constant 0 : index
    %c512 = arith.constant 512 : index
    %7 = vector.load %arg1[%c0_6, %c512] : memref<8x1536xf32, #tpu.memory_space<vmem>>, vector<8x512xf32>
    %cst_7 = arith.constant 5.870000e-01 : f32
    %8 = vector.broadcast %cst_7 : f32 to vector<8x512xf32>
    %9 = arith.mulf %8, %7 : vector<8x512xf32>
    %10 = arith.addf %6, %9 : vector<8x512xf32>
    %c0_8 = arith.constant 0 : index
    %c1024 = arith.constant 1024 : index
    %11 = vector.load %arg1[%c0_8, %c1024] : memref<8x1536xf32, #tpu.memory_space<vmem>>, vector<8x512xf32>
    %cst_9 = arith.constant 1.140000e-01 : f32
    %12 = vector.broadcast %cst_9 : f32 to vector<8x512xf32>
    %13 = arith.mulf %12, %11 : vector<8x512xf32>
    %14 = arith.addf %10, %13 : vector<8x512xf32>
    %c0_10 = arith.constant 0 : index
    %c0_11 = arith.constant 0 : index
    %15 = vector.load %arg2[%c0_10, %c0_11] : memref<8x1536xf32, #tpu.memory_space<vmem>>, vector<8x512xf32>
    %cst_12 = arith.constant 2.989000e-01 : f32
    %16 = vector.broadcast %cst_12 : f32 to vector<8x512xf32>
    %17 = arith.mulf %16, %15 : vector<8x512xf32>
    %c0_13 = arith.constant 0 : index
    %c512_14 = arith.constant 512 : index
    %18 = vector.load %arg2[%c0_13, %c512_14] : memref<8x1536xf32, #tpu.memory_space<vmem>>, vector<8x512xf32>
    %cst_15 = arith.constant 5.870000e-01 : f32
    %19 = vector.broadcast %cst_15 : f32 to vector<8x512xf32>
    %20 = arith.mulf %19, %18 : vector<8x512xf32>
    %21 = arith.addf %17, %20 : vector<8x512xf32>
    %c0_16 = arith.constant 0 : index
    %c1024_17 = arith.constant 1024 : index
    %22 = vector.load %arg2[%c0_16, %c1024_17] : memref<8x1536xf32, #tpu.memory_space<vmem>>, vector<8x512xf32>
    %cst_18 = arith.constant 1.140000e-01 : f32
    %23 = vector.broadcast %cst_18 : f32 to vector<8x512xf32>
    %24 = arith.mulf %23, %22 : vector<8x512xf32>
    %25 = arith.addf %21, %24 : vector<8x512xf32>
    %c1_i32 = arith.constant 1 : i32
    %26 = tpu.dynamic_rotate %14 by %c1_i32 dim 1 : vector<8x512xf32>, i32 -> vector<8x512xf32>
    %c511_i32 = arith.constant 511 : i32
    %27 = tpu.dynamic_rotate %14 by %c511_i32 dim 1 : vector<8x512xf32>, i32 -> vector<8x512xf32>
    %c2_i32 = arith.constant 2 : i32
    %28 = tpu.dynamic_rotate %14 by %c2_i32 dim 1 : vector<8x512xf32>, i32 -> vector<8x512xf32>
    %c510_i32 = arith.constant 510 : i32
    %29 = tpu.dynamic_rotate %14 by %c510_i32 dim 1 : vector<8x512xf32>, i32 -> vector<8x512xf32>
    %c20_i32 = arith.constant 20 : i32
    %30 = tpu.dynamic_rotate %14 by %c20_i32 dim 1 : vector<8x512xf32>, i32 -> vector<8x512xf32>
    %c492_i32 = arith.constant 492 : i32
    %31 = tpu.dynamic_rotate %14 by %c492_i32 dim 1 : vector<8x512xf32>, i32 -> vector<8x512xf32>
    %c40_i32 = arith.constant 40 : i32
    %32 = tpu.dynamic_rotate %14 by %c40_i32 dim 1 : vector<8x512xf32>, i32 -> vector<8x512xf32>
    %c472_i32 = arith.constant 472 : i32
    %33 = tpu.dynamic_rotate %14 by %c472_i32 dim 1 : vector<8x512xf32>, i32 -> vector<8x512xf32>
    %cst_19 = arith.constant 0.274068624 : f32
    %34 = vector.broadcast %cst_19 : f32 to vector<8x512xf32>
    %35 = arith.mulf %34, %26 : vector<8x512xf32>
    %cst_20 = arith.constant 0.451862752 : f32
    %36 = vector.broadcast %cst_20 : f32 to vector<8x512xf32>
    %37 = arith.mulf %36, %14 : vector<8x512xf32>
    %38 = arith.addf %35, %37 : vector<8x512xf32>
    %cst_21 = arith.constant 0.274068624 : f32
    %39 = vector.broadcast %cst_21 : f32 to vector<8x512xf32>
    %40 = arith.mulf %39, %27 : vector<8x512xf32>
    %41 = arith.addf %38, %40 : vector<8x512xf32>
    %cst_22 = arith.constant 0.274068624 : f32
    %42 = vector.broadcast %cst_22 : f32 to vector<8x512xf32>
    %43 = arith.mulf %42, %30 : vector<8x512xf32>
    %cst_23 = arith.constant 0.451862752 : f32
    %44 = vector.broadcast %cst_23 : f32 to vector<8x512xf32>
    %45 = arith.mulf %44, %14 : vector<8x512xf32>
    %46 = arith.addf %43, %45 : vector<8x512xf32>
    %cst_24 = arith.constant 0.274068624 : f32
    %47 = vector.broadcast %cst_24 : f32 to vector<8x512xf32>
    %48 = arith.mulf %47, %31 : vector<8x512xf32>
    %49 = arith.addf %46, %48 : vector<8x512xf32>
    %cst_25 = arith.constant 0.133574709 : f32
    %50 = vector.broadcast %cst_25 : f32 to vector<8x512xf32>
    %51 = arith.mulf %50, %28 : vector<8x512xf32>
    %cst_26 = arith.constant 0.22921513 : f32
    %52 = vector.broadcast %cst_26 : f32 to vector<8x512xf32>
    %53 = arith.mulf %52, %26 : vector<8x512xf32>
    %54 = arith.addf %51, %53 : vector<8x512xf32>
    %cst_27 = arith.constant 0.274420321 : f32
    %55 = vector.broadcast %cst_27 : f32 to vector<8x512xf32>
    %56 = arith.mulf %55, %14 : vector<8x512xf32>
    %57 = arith.addf %54, %56 : vector<8x512xf32>
    %cst_28 = arith.constant 0.22921513 : f32
    %58 = vector.broadcast %cst_28 : f32 to vector<8x512xf32>
    %59 = arith.mulf %58, %27 : vector<8x512xf32>
    %60 = arith.addf %57, %59 : vector<8x512xf32>
    %cst_29 = arith.constant 0.133574709 : f32
    %61 = vector.broadcast %cst_29 : f32 to vector<8x512xf32>
    %62 = arith.mulf %61, %29 : vector<8x512xf32>
    %63 = arith.addf %60, %62 : vector<8x512xf32>
    %cst_30 = arith.constant 0.133574709 : f32
    %64 = vector.broadcast %cst_30 : f32 to vector<8x512xf32>
    %65 = arith.mulf %64, %32 : vector<8x512xf32>
    %cst_31 = arith.constant 0.22921513 : f32
    %66 = vector.broadcast %cst_31 : f32 to vector<8x512xf32>
    %67 = arith.mulf %66, %30 : vector<8x512xf32>
    %68 = arith.addf %65, %67 : vector<8x512xf32>
    %cst_32 = arith.constant 0.274420321 : f32
    %69 = vector.broadcast %cst_32 : f32 to vector<8x512xf32>
    %70 = arith.mulf %69, %14 : vector<8x512xf32>
    %71 = arith.addf %68, %70 : vector<8x512xf32>
    %cst_33 = arith.constant 0.22921513 : f32
    %72 = vector.broadcast %cst_33 : f32 to vector<8x512xf32>
    %73 = arith.mulf %72, %31 : vector<8x512xf32>
    %74 = arith.addf %71, %73 : vector<8x512xf32>
    %cst_34 = arith.constant 0.133574709 : f32
    %75 = vector.broadcast %cst_34 : f32 to vector<8x512xf32>
    %76 = arith.mulf %75, %33 : vector<8x512xf32>
    %77 = arith.addf %74, %76 : vector<8x512xf32>
    %c492_i32_35 = arith.constant 492 : i32
    %78 = tpu.dynamic_rotate %41 by %c492_i32_35 dim 1 : vector<8x512xf32>, i32 -> vector<8x512xf32>
    %c20_i32_36 = arith.constant 20 : i32
    %79 = tpu.dynamic_rotate %41 by %c20_i32_36 dim 1 : vector<8x512xf32>, i32 -> vector<8x512xf32>
    %80 = arith.subf %78, %79 : vector<8x512xf32>
    %c511_i32_37 = arith.constant 511 : i32
    %81 = tpu.dynamic_rotate %49 by %c511_i32_37 dim 1 : vector<8x512xf32>, i32 -> vector<8x512xf32>
    %c1_i32_38 = arith.constant 1 : i32
    %82 = tpu.dynamic_rotate %49 by %c1_i32_38 dim 1 : vector<8x512xf32>, i32 -> vector<8x512xf32>
    %83 = arith.subf %81, %82 : vector<8x512xf32>
    %c40_i32_39 = arith.constant 40 : i32
    %84 = tpu.dynamic_rotate %63 by %c40_i32_39 dim 1 : vector<8x512xf32>, i32 -> vector<8x512xf32>
    %cst_40 = arith.constant -1.000000e+00 : f32
    %85 = vector.broadcast %cst_40 : f32 to vector<8x512xf32>
    %86 = arith.mulf %85, %84 : vector<8x512xf32>
    %c20_i32_41 = arith.constant 20 : i32
    %87 = tpu.dynamic_rotate %63 by %c20_i32_41 dim 1 : vector<8x512xf32>, i32 -> vector<8x512xf32>
    %cst_42 = arith.constant -5.000000e-01 : f32
    %88 = vector.broadcast %cst_42 : f32 to vector<8x512xf32>
    %89 = arith.mulf %88, %87 : vector<8x512xf32>
    %90 = arith.addf %86, %89 : vector<8x512xf32>
    %c492_i32_43 = arith.constant 492 : i32
    %91 = tpu.dynamic_rotate %63 by %c492_i32_43 dim 1 : vector<8x512xf32>, i32 -> vector<8x512xf32>
    %cst_44 = arith.constant 5.000000e-01 : f32
    %92 = vector.broadcast %cst_44 : f32 to vector<8x512xf32>
    %93 = arith.mulf %92, %91 : vector<8x512xf32>
    %94 = arith.addf %90, %93 : vector<8x512xf32>
    %c472_i32_45 = arith.constant 472 : i32
    %95 = tpu.dynamic_rotate %63 by %c472_i32_45 dim 1 : vector<8x512xf32>, i32 -> vector<8x512xf32>
    %cst_46 = arith.constant 1.000000e+00 : f32
    %96 = vector.broadcast %cst_46 : f32 to vector<8x512xf32>
    %97 = arith.mulf %96, %95 : vector<8x512xf32>
    %98 = arith.addf %94, %97 : vector<8x512xf32>
    %c2_i32_47 = arith.constant 2 : i32
    %99 = tpu.dynamic_rotate %77 by %c2_i32_47 dim 1 : vector<8x512xf32>, i32 -> vector<8x512xf32>
    %cst_48 = arith.constant -1.000000e+00 : f32
    %100 = vector.broadcast %cst_48 : f32 to vector<8x512xf32>
    %101 = arith.mulf %100, %99 : vector<8x512xf32>
    %c1_i32_49 = arith.constant 1 : i32
    %102 = tpu.dynamic_rotate %77 by %c1_i32_49 dim 1 : vector<8x512xf32>, i32 -> vector<8x512xf32>
    %cst_50 = arith.constant -5.000000e-01 : f32
    %103 = vector.broadcast %cst_50 : f32 to vector<8x512xf32>
    %104 = arith.mulf %103, %102 : vector<8x512xf32>
    %105 = arith.addf %101, %104 : vector<8x512xf32>
    %c511_i32_51 = arith.constant 511 : i32
    %106 = tpu.dynamic_rotate %77 by %c511_i32_51 dim 1 : vector<8x512xf32>, i32 -> vector<8x512xf32>
    %cst_52 = arith.constant 5.000000e-01 : f32
    %107 = vector.broadcast %cst_52 : f32 to vector<8x512xf32>
    %108 = arith.mulf %107, %106 : vector<8x512xf32>
    %109 = arith.addf %105, %108 : vector<8x512xf32>
    %c510_i32_53 = arith.constant 510 : i32
    %110 = tpu.dynamic_rotate %77 by %c510_i32_53 dim 1 : vector<8x512xf32>, i32 -> vector<8x512xf32>
    %cst_54 = arith.constant 1.000000e+00 : f32
    %111 = vector.broadcast %cst_54 : f32 to vector<8x512xf32>
    %112 = arith.mulf %111, %110 : vector<8x512xf32>
    %113 = arith.addf %109, %112 : vector<8x512xf32>
    %114 = arith.mulf %80, %80 : vector<8x512xf32>
    %115 = arith.mulf %83, %83 : vector<8x512xf32>
    %116 = arith.addf %114, %115 : vector<8x512xf32>
    %cst_55 = arith.constant 9.99999993E-9 : f32
    %117 = vector.broadcast %cst_55 : f32 to vector<8x512xf32>
    %118 = arith.addf %116, %117 : vector<8x512xf32>
    %119 = math.sqrt %118 : vector<8x512xf32>
    %120 = arith.mulf %98, %98 : vector<8x512xf32>
    %121 = arith.mulf %113, %113 : vector<8x512xf32>
    %122 = arith.addf %120, %121 : vector<8x512xf32>
    %cst_56 = arith.constant 9.99999993E-9 : f32
    %123 = vector.broadcast %cst_56 : f32 to vector<8x512xf32>
    %124 = arith.addf %122, %123 : vector<8x512xf32>
    %125 = math.sqrt %124 : vector<8x512xf32>
    %cst_57 = arith.constant 1.000000e+00 : f32
    %126 = vector.broadcast %cst_57 : f32 to vector<8x512xf32>
    %127 = arith.mulf %126, %119 : vector<8x512xf32>
    %cst_58 = arith.constant 5.000000e-01 : f32
    %128 = vector.broadcast %cst_58 : f32 to vector<8x512xf32>
    %129 = arith.mulf %128, %125 : vector<8x512xf32>
    %130 = arith.addf %127, %129 : vector<8x512xf32>
    %cst_59 = arith.constant 1.000000e-01 : f32
    %131 = vector.broadcast %cst_59 : f32 to vector<8x512xf32>
    %132 = arith.subf %130, %131 : vector<8x512xf32>
    %cst_60 = arith.constant 5.000000e+00 : f32
    %133 = vector.broadcast %cst_60 : f32 to vector<8x512xf32>
    %134 = arith.mulf %132, %133 : vector<8x512xf32>
    %135 = arith.negf %134 : vector<8x512xf32>
    %136 = math.exp %135 : vector<8x512xf32>
    %cst_61 = arith.constant 1.000000e+00 : f32
    %137 = vector.broadcast %cst_61 : f32 to vector<8x512xf32>
    %138 = arith.addf %137, %136 : vector<8x512xf32>
    %139 = arith.divf %137, %138 : vector<8x512xf32>
    %cst_62 = arith.constant -3.000000e+38 : f32
    %140 = vector.shape_cast %2 : vector<1x512xi1> to vector<1x512xi1>
    %141 = vector.broadcast %140 : vector<1x512xi1> to vector<8x512xi1>
    %142 = vector.broadcast %cst_62 : f32 to vector<8x512xf32>
    %143 = arith.select %141, %139, %142 : vector<8x512xi1>, vector<8x512xf32>
    %cst_63 = arith.constant dense<0xFF800000> : vector<8xf32>
    %144 = vector.multi_reduction <maximumf>, %143, %cst_63 [1] : vector<8x512xf32> to vector<8xf32>
    %145 = vector.shape_cast %144 : vector<8xf32> to vector<8x1xf32>
    %cst_64 = arith.constant 3.000000e+38 : f32
    %146 = vector.shape_cast %2 : vector<1x512xi1> to vector<1x512xi1>
    %147 = vector.broadcast %146 : vector<1x512xi1> to vector<8x512xi1>
    %148 = vector.broadcast %cst_64 : f32 to vector<8x512xf32>
    %149 = arith.select %147, %139, %148 : vector<8x512xi1>, vector<8x512xf32>
    %cst_65 = arith.constant dense<0x7F800000> : vector<8xf32>
    %150 = vector.multi_reduction <minimumf>, %149, %cst_65 [1] : vector<8x512xf32> to vector<8xf32>
    %151 = vector.shape_cast %150 : vector<8xf32> to vector<8x1xf32>
    %152 = vector.broadcast %151 : vector<8x1xf32> to vector<8x512xf32>
    %153 = arith.subf %139, %152 : vector<8x512xf32>
    %154 = arith.subf %145, %151 : vector<8x1xf32>
    %cst_66 = arith.constant 9.99999993E-9 : f32
    %155 = vector.broadcast %cst_66 : f32 to vector<8x1xf32>
    %156 = arith.addf %154, %155 : vector<8x1xf32>
    %157 = tpu.reciprocal %156 : vector<8x1xf32> -> vector<8x1xf32>
    %158 = vector.broadcast %157 : vector<8x1xf32> to vector<8x512xf32>
    %159 = arith.mulf %153, %158 : vector<8x512xf32>
    %160 = vector.broadcast %3 : vector<8x1xf32> to vector<8x512xf32>
    %161 = arith.mulf %159, %160 : vector<8x512xf32>
    %cst_67 = arith.constant 1.000000e+00 : f32
    %162 = vector.broadcast %cst_67 : f32 to vector<8x512xf32>
    %163 = arith.addf %162, %161 : vector<8x512xf32>
    %c0_68 = arith.constant 0 : index
    %c0_69 = arith.constant 0 : index
    %164 = vector.load %arg1[%c0_68, %c0_69] : memref<8x1536xf32, #tpu.memory_space<vmem>>, vector<8x512xf32>
    %c0_70 = arith.constant 0 : index
    %c0_71 = arith.constant 0 : index
    %165 = vector.load %arg2[%c0_70, %c0_71] : memref<8x1536xf32, #tpu.memory_space<vmem>>, vector<8x512xf32>
    %166 = arith.subf %164, %165 : vector<8x512xf32>
    %167 = arith.mulf %166, %163 : vector<8x512xf32>
    %168 = arith.mulf %167, %167 : vector<8x512xf32>
    %c0_72 = arith.constant 0 : index
    %c512_73 = arith.constant 512 : index
    %169 = vector.load %arg1[%c0_72, %c512_73] : memref<8x1536xf32, #tpu.memory_space<vmem>>, vector<8x512xf32>
    %c0_74 = arith.constant 0 : index
    %c512_75 = arith.constant 512 : index
    %170 = vector.load %arg2[%c0_74, %c512_75] : memref<8x1536xf32, #tpu.memory_space<vmem>>, vector<8x512xf32>
    %171 = arith.subf %169, %170 : vector<8x512xf32>
    %172 = arith.mulf %171, %163 : vector<8x512xf32>
    %173 = arith.mulf %172, %172 : vector<8x512xf32>
    %174 = arith.addf %168, %173 : vector<8x512xf32>
    %c0_76 = arith.constant 0 : index
    %c1024_77 = arith.constant 1024 : index
    %175 = vector.load %arg1[%c0_76, %c1024_77] : memref<8x1536xf32, #tpu.memory_space<vmem>>, vector<8x512xf32>
    %c0_78 = arith.constant 0 : index
    %c1024_79 = arith.constant 1024 : index
    %176 = vector.load %arg2[%c0_78, %c1024_79] : memref<8x1536xf32, #tpu.memory_space<vmem>>, vector<8x512xf32>
    %177 = arith.subf %175, %176 : vector<8x512xf32>
    %178 = arith.mulf %177, %163 : vector<8x512xf32>
    %179 = arith.mulf %178, %178 : vector<8x512xf32>
    %180 = arith.addf %174, %179 : vector<8x512xf32>
    %cst_80 = arith.constant dense<0.000000e+00> : vector<8xf32>
    %181 = vector.multi_reduction <add>, %180, %cst_80 [1] : vector<8x512xf32> to vector<8xf32>
    %182 = vector.shape_cast %181 : vector<8xf32> to vector<8x1xf32>
    %cst_81 = arith.constant 0.00130208337 : f32
    %183 = vector.broadcast %cst_81 : f32 to vector<8x1xf32>
    %184 = arith.mulf %182, %183 : vector<8x1xf32>
    %185 = arith.addf %30, %14 : vector<8x512xf32>
    %186 = arith.addf %185, %31 : vector<8x512xf32>
    %187 = arith.addf %26, %14 : vector<8x512xf32>
    %188 = arith.addf %187, %27 : vector<8x512xf32>
    %c1_i32_82 = arith.constant 1 : i32
    %189 = tpu.dynamic_rotate %186 by %c1_i32_82 dim 1 : vector<8x512xf32>, i32 -> vector<8x512xf32>
    %190 = arith.subf %189, %186 : vector<8x512xf32>
    %c511_i32_83 = arith.constant 511 : i32
    %191 = tpu.dynamic_rotate %186 by %c511_i32_83 dim 1 : vector<8x512xf32>, i32 -> vector<8x512xf32>
    %192 = arith.subf %190, %191 : vector<8x512xf32>
    %c20_i32_84 = arith.constant 20 : i32
    %193 = tpu.dynamic_rotate %188 by %c20_i32_84 dim 1 : vector<8x512xf32>, i32 -> vector<8x512xf32>
    %194 = arith.subf %193, %188 : vector<8x512xf32>
    %c492_i32_85 = arith.constant 492 : i32
    %195 = tpu.dynamic_rotate %188 by %c492_i32_85 dim 1 : vector<8x512xf32>, i32 -> vector<8x512xf32>
    %196 = arith.subf %194, %195 : vector<8x512xf32>
    %197 = arith.mulf %192, %192 : vector<8x512xf32>
    %198 = arith.mulf %196, %196 : vector<8x512xf32>
    %199 = arith.addf %197, %198 : vector<8x512xf32>
    %cst_86 = arith.constant 9.99999997E-7 : f32
    %200 = vector.broadcast %cst_86 : f32 to vector<8x512xf32>
    %201 = arith.addf %199, %200 : vector<8x512xf32>
    %202 = math.sqrt %201 : vector<8x512xf32>
    %c1_i32_87 = arith.constant 1 : i32
    %203 = tpu.dynamic_rotate %25 by %c1_i32_87 dim 1 : vector<8x512xf32>, i32 -> vector<8x512xf32>
    %c511_i32_88 = arith.constant 511 : i32
    %204 = tpu.dynamic_rotate %25 by %c511_i32_88 dim 1 : vector<8x512xf32>, i32 -> vector<8x512xf32>
    %c20_i32_89 = arith.constant 20 : i32
    %205 = tpu.dynamic_rotate %25 by %c20_i32_89 dim 1 : vector<8x512xf32>, i32 -> vector<8x512xf32>
    %c492_i32_90 = arith.constant 492 : i32
    %206 = tpu.dynamic_rotate %25 by %c492_i32_90 dim 1 : vector<8x512xf32>, i32 -> vector<8x512xf32>
    %207 = arith.addf %205, %25 : vector<8x512xf32>
    %208 = arith.addf %207, %206 : vector<8x512xf32>
    %209 = arith.addf %203, %25 : vector<8x512xf32>
    %210 = arith.addf %209, %204 : vector<8x512xf32>
    %c1_i32_91 = arith.constant 1 : i32
    %211 = tpu.dynamic_rotate %208 by %c1_i32_91 dim 1 : vector<8x512xf32>, i32 -> vector<8x512xf32>
    %212 = arith.subf %211, %208 : vector<8x512xf32>
    %c511_i32_92 = arith.constant 511 : i32
    %213 = tpu.dynamic_rotate %208 by %c511_i32_92 dim 1 : vector<8x512xf32>, i32 -> vector<8x512xf32>
    %214 = arith.subf %212, %213 : vector<8x512xf32>
    %c20_i32_93 = arith.constant 20 : i32
    %215 = tpu.dynamic_rotate %210 by %c20_i32_93 dim 1 : vector<8x512xf32>, i32 -> vector<8x512xf32>
    %216 = arith.subf %215, %210 : vector<8x512xf32>
    %c492_i32_94 = arith.constant 492 : i32
    %217 = tpu.dynamic_rotate %210 by %c492_i32_94 dim 1 : vector<8x512xf32>, i32 -> vector<8x512xf32>
    %218 = arith.subf %216, %217 : vector<8x512xf32>
    %219 = arith.mulf %214, %214 : vector<8x512xf32>
    %220 = arith.mulf %218, %218 : vector<8x512xf32>
    %221 = arith.addf %219, %220 : vector<8x512xf32>
    %cst_95 = arith.constant 9.99999997E-7 : f32
    %222 = vector.broadcast %cst_95 : f32 to vector<8x512xf32>
    %223 = arith.addf %221, %222 : vector<8x512xf32>
    %224 = math.sqrt %223 : vector<8x512xf32>
    %225 = arith.subf %202, %224 : vector<8x512xf32>
    %226 = math.absf %225 : vector<8x512xf32>
    %cst_96 = arith.constant 4.000000e-01 : f32
    %227 = vector.broadcast %cst_96 : f32 to vector<8x512xf32>
    %228 = arith.cmpf olt, %226, %227 : vector<8x512xf32>
    %cst_97 = arith.constant 5.000000e-01 : f32
    %229 = vector.broadcast %cst_97 : f32 to vector<8x512xf32>
    %230 = arith.mulf %229, %225 : vector<8x512xf32>
    %231 = arith.mulf %230, %225 : vector<8x512xf32>
    %cst_98 = arith.constant 2.500000e+00 : f32
    %232 = vector.broadcast %cst_98 : f32 to vector<8x512xf32>
    %233 = arith.mulf %231, %232 : vector<8x512xf32>
    %cst_99 = arith.constant 2.000000e-01 : f32
    %234 = vector.broadcast %cst_99 : f32 to vector<8x512xf32>
    %235 = arith.subf %226, %234 : vector<8x512xf32>
    %236 = arith.select %228, %233, %235 : vector<8x512xi1>, vector<8x512xf32>
    %cst_100 = arith.constant 5.000000e-01 : f32
    %237 = vector.broadcast %cst_100 : f32 to vector<8x512xf32>
    %238 = arith.mulf %237, %225 : vector<8x512xf32>
    %239 = arith.mulf %238, %225 : vector<8x512xf32>
    %cst_101 = arith.constant 5.000000e-01 : f32
    %240 = vector.broadcast %cst_101 : f32 to vector<8x512xf32>
    %241 = arith.mulf %240, %236 : vector<8x512xf32>
    %242 = arith.addf %239, %241 : vector<8x512xf32>
    %243 = vector.broadcast %0 : vector<1x512xf32> to vector<8x512xf32>
    %244 = arith.mulf %242, %243 : vector<8x512xf32>
    %cst_102 = arith.constant dense<0.000000e+00> : vector<8xf32>
    %245 = vector.multi_reduction <add>, %244, %cst_102 [1] : vector<8x512xf32> to vector<8xf32>
    %246 = vector.shape_cast %245 : vector<8xf32> to vector<8x1xf32>
    %cst_103 = arith.constant 3.906250e-03 : f32
    %247 = vector.broadcast %cst_103 : f32 to vector<8x1xf32>
    %248 = arith.mulf %246, %247 : vector<8x1xf32>
    %249 = arith.mulf %248, %3 : vector<8x1xf32>
    %c0_104 = arith.constant 0 : index
    %c0_105 = arith.constant 0 : index
    %250 = vector.load %arg5[%c0_104, %c0_105] : memref<8x2xf32, #tpu.memory_space<vmem>>, vector<8x1xf32>
    tpu.vector_store %arg5[%c0_104, %c0_105], %184 {strides = array<i32>} : memref<8x2xf32, #tpu.memory_space<vmem>>, vector<8x1xf32>,
    %c0_106 = arith.constant 0 : index
    %c1 = arith.constant 1 : index
    %251 = vector.load %arg5[%c0_106, %c1] : memref<8x2xf32, #tpu.memory_space<vmem>>, vector<8x1xf32>
    tpu.vector_store %arg5[%c0_106, %c1], %249 {strides = array<i32>} : memref<8x2xf32, #tpu.memory_space<vmem>>, vector<8x1xf32>,
    return
  }
  func.func @transform_0(%arg0: i32) -> (i32, i32) {
    %c0_i32 = arith.constant 0 : i32
    %c0_i32_0 = arith.constant 0 : i32
    return %arg0, %c0_i32 : i32, i32
  }
  func.func @transform_1(%arg0: i32) -> (i32, i32) {
    %c0_i32 = arith.constant 0 : i32
    %c0_i32_0 = arith.constant 0 : i32
    return %arg0, %c0_i32 : i32, i32
  }
  func.func @transform_2(%arg0: i32) -> (i32, i32) {
    %c0_i32 = arith.constant 0 : i32
    %c0_i32_0 = arith.constant 0 : i32
    return %arg0, %c0_i32 : i32, i32
  }
  func.func @transform_3(%arg0: i32) -> (i32, i32) {
    %c0_i32 = arith.constant 0 : i32
    %c0_i32_0 = arith.constant 0 : i32
    %c0_i32_1 = arith.constant 0 : i32
    return %c0_i32, %c0_i32_0 : i32, i32
  }
  func.func @transform_4(%arg0: i32) -> (i32, i32) {
    %c0_i32 = arith.constant 0 : i32
    %c0_i32_0 = arith.constant 0 : i32
    return %arg0, %c0_i32 : i32, i32
  }
}

</mosaic_0001>

<llo_original>
// kernel: tpu_custom_call.1
$region0: #{tpu_custom_call.1}
  #allocation0 [shape = 'u32[]', space=smem, size = 0x4, offset = 0x4, fixed_abs, tag = 'smem constant byte address 0x4 - core index']
  #allocation1 [shape = 'u32[72,128]{1,0:T(1,128)}', space=vmem, size = 0x9000, scoped, tag = 'internal scratch']
  %s0 = inlined_call_operand.hbm [shape: f32[8,1536], index: 0, kind: input, shape index: {}]
  %s1 = inlined_call_operand.hbm [shape: f32[8,1536], index: 1, kind: input, shape index: {}]
  %s2 = inlined_call_operand.vmem [shape: f32[8,1], index: 2, kind: input, shape index: {}]
  %s3 = inlined_call_operand.vmem [shape: f32[1,512], index: 3, kind: input, shape index: {}]
  %s4 = inlined_call_operand.vmem [shape: f32[8,2], index: 4, kind: output, shape index: {}]
  %s5 = sld [smem:[#allocation0]]
  $region34: #{tpu_custom_call.1} parent=0
    _
  %s7 = ssub.s32 1, %s5
  %s8 = scalar_select 0, %s7, %s5
  $region1: #{tpu_custom_call.1} parent=0
    #allocation2 [shape = 'u8[49152]{0}', space=vmem, size = 0xc000, scoped, tag = 'input window, operand 0, single buffered']
    #allocation3 [shape = 's32[1]{0}', space=sflag, size = 0x4, scoped, tag = 'scoped memory for tpu_custom_call.1']
    #allocation4 [shape = 'u8[49152]{0}', space=vmem, size = 0xc000, scoped, tag = 'input window, operand 1, single buffered']
    #allocation5 [shape = 's32[1]{0}', space=sflag, size = 0x4, scoped, tag = 'scoped memory for tpu_custom_call.1']
    %9 = vsyncpa [#allocation3], 0
    %10 = vsyncpa [#allocation5], 0
    // Predicated region
    $region2: #{tpu_custom_call.1} parent=1 // pred_check
      _
    $region3: #{tpu_custom_call.1} parent=1 // pred_check_branch
      %12 = sbr.rel (0) target = $region5
    $region4: #{tpu_custom_call.1} parent=1 // pred_region
      %14 = vsyncadd [#allocation3], 0
      %s16 = sshll.u32 %s0, 4
      %s17 = int_to_ptr.hbm [resolvable:$true] %s16
      %s18 = sshll.u32 [#allocation2], 4
      %s19 = int_to_ptr.vmem [resolvable:$true] %s18
      %21 = dma.hbm_to_vmem [thread:$0]  %s17, 1536, %s19, [#allocation3]
    $region5: #{tpu_custom_call.1} parent=1 // pred_fallthru
      _
    // Predicated region
    $region6: #{tpu_custom_call.1} parent=1 // pred_check
      _
    $region7: #{tpu_custom_call.1} parent=1 // pred_check_branch
      %23 = sbr.rel (0) target = $region9
    $region8: #{tpu_custom_call.1} parent=1 // pred_region
      %25 = vsyncadd [#allocation5], 0
      %s27 = sshll.u32 %s1, 4
      %s28 = int_to_ptr.hbm [resolvable:$true] %s27
      %s29 = sshll.u32 [#allocation4], 4
      %s30 = int_to_ptr.vmem [resolvable:$true] %s29
      %32 = dma.hbm_to_vmem [thread:$0]  %s28, 1536, %s30, [#allocation5]
    $region9: #{tpu_custom_call.1} parent=1 // pred_fallthru
      _
    // Predicated region
    $region10: #{tpu_custom_call.1} parent=1 // pred_check
      _
    $region11: #{tpu_custom_call.1} parent=1 // pred_check_branch
      %34 = sbr.rel (0) target = $region13
    $region12: #{tpu_custom_call.1} parent=1 // pred_region
      _
    $region13: #{tpu_custom_call.1} parent=1 // pred_fallthru
      _
    // Predicated region
    $region14: #{tpu_custom_call.1} parent=1 // pred_check
      _
    $region15: #{tpu_custom_call.1} parent=1 // pred_check_branch
      %36 = sbr.rel (0) target = $region17
    $region16: #{tpu_custom_call.1} parent=1 // pred_region
      _
    $region17: #{tpu_custom_call.1} parent=1 // pred_fallthru
      _
    // Predicated region
    $region18: #{tpu_custom_call.1} parent=1 // pred_check
      _
    $region19: #{tpu_custom_call.1} parent=1 // pred_check_branch
      %38 = sbr.rel (0) target = $region21
    $region20: #{tpu_custom_call.1} parent=1 // pred_region
      %40 = dma.done [#allocation3], 1536
    $region21: #{tpu_custom_call.1} parent=1 // pred_fallthru
      _
    // Predicated region
    $region22: #{tpu_custom_call.1} parent=1 // pred_check
      _
    $region23: #{tpu_custom_call.1} parent=1 // pred_check_branch
      %42 = sbr.rel (0) target = $region25
    $region24: #{tpu_custom_call.1} parent=1 // pred_region
      %44 = dma.done [#allocation5], 1536
    $region25: #{tpu_custom_call.1} parent=1 // pred_fallthru
      _
    %v45 = vld [vmem:[%s3] sm:$0xf]
    %vm46 = vcmp.gt.f32.partialorder %v45, 0.5
    %v47 = vld [vmem:[%s2] sm:$0xff]
    %v48 = vld [vmem:[#allocation2] sm:$0xff]
    %v49 = vld [vmem:[#allocation2 + $0x8] sm:$0xff]
    %v50 = vld [vmem:[#allocation2 + $0x10] sm:$0xff]
    %v51 = vld [vmem:[#allocation2 + $0x18] sm:$0xff]
    %v52 = vmul.f32 %v48, 0.2989
    %v53 = vmul.f32 %v49, 0.2989
    %v54 = vmul.f32 %v50, 0.2989
    %v55 = vmul.f32 %v51, 0.2989
    %v56 = vld [vmem:[#allocation2 + $0x20] sm:$0xff]
    %v57 = vld [vmem:[#allocation2 + $0x28] sm:$0xff]
    %v58 = vld [vmem:[#allocation2 + $0x30] sm:$0xff]
    %v59 = vld [vmem:[#allocation2 + $0x38] sm:$0xff]
    %v60 = vmul.f32 %v56, 0.587
    %v61 = vmul.f32 %v57, 0.587
    %v62 = vmul.f32 %v58, 0.587
    %v63 = vmul.f32 %v59, 0.587
    %v64 = vadd.f32 %v52, %v60
    %v65 = vadd.f32 %v53, %v61
    %v66 = vadd.f32 %v54, %v62
    %v67 = vadd.f32 %v55, %v63
    %v68 = vld [vmem:[#allocation2 + $0x40] sm:$0xff]
    %v69 = vld [vmem:[#allocation2 + $0x48] sm:$0xff]
    %v70 = vld [vmem:[#allocation2 + $0x50] sm:$0xff]
    %v71 = vld [vmem:[#allocation2 + $0x58] sm:$0xff]
    %v72 = vmul.f32 %v68, 0.114
    %v73 = vmul.f32 %v69, 0.114
    %v74 = vmul.f32 %v70, 0.114
    %v75 = vmul.f32 %v71, 0.114
    %v76 = vadd.f32 %v64, %v72
    %v77 = vadd.f32 %v65, %v73
    %v78 = vadd.f32 %v66, %v74
    %v79 = vadd.f32 %v67, %v75
    %v80 = vld [vmem:[#allocation4] sm:$0xff]
    %v81 = vld [vmem:[#allocation4 + $0x8] sm:$0xff]
    %v82 = vld [vmem:[#allocation4 + $0x10] sm:$0xff]
    %v83 = vld [vmem:[#allocation4 + $0x18] sm:$0xff]
    %v84 = vmul.f32 %v80, 0.2989
    %v85 = vmul.f32 %v81, 0.2989
    %v86 = vmul.f32 %v82, 0.2989
    %v87 = vmul.f32 %v83, 0.2989
    %v88 = vld [vmem:[#allocation4 + $0x20] sm:$0xff]
    %v89 = vld [vmem:[#allocation4 + $0x28] sm:$0xff]
    %v90 = vld [vmem:[#allocation4 + $0x30] sm:$0xff]
    %v91 = vld [vmem:[#allocation4 + $0x38] sm:$0xff]
    %v92 = vmul.f32 %v88, 0.587
    %v93 = vmul.f32 %v89, 0.587
    %v94 = vmul.f32 %v90, 0.587
    %v95 = vmul.f32 %v91, 0.587
    %v96 = vadd.f32 %v84, %v92
    %v97 = vadd.f32 %v85, %v93
    %v98 = vadd.f32 %v86, %v94
    %v99 = vadd.f32 %v87, %v95
    %v100 = vld [vmem:[#allocation4 + $0x40] sm:$0xff]
    %v101 = vld [vmem:[#allocation4 + $0x48] sm:$0xff]
    %v102 = vld [vmem:[#allocation4 + $0x50] sm:$0xff]
    %v103 = vld [vmem:[#allocation4 + $0x58] sm:$0xff]
    %v104 = vmul.f32 %v100, 0.114
    %v105 = vmul.f32 %v101, 0.114
    %v106 = vmul.f32 %v102, 0.114
    %v107 = vmul.f32 %v103, 0.114
    %v108 = vadd.f32 %v96, %v104
    %v109 = vadd.f32 %v97, %v105
    %v110 = vadd.f32 %v98, %v106
    %v111 = vadd.f32 %v99, %v107
    %112 = vrot.lane.b32.xlu0 %v76, 1
    %v113 = vpop.permute.xlu0 %112
    %114 = vrot.lane.b32.xlu0 %v77, 1
    %v115 = vpop.permute.xlu0 %114
    %116 = vrot.lane.b32.xlu0 %v78, 1
    %v117 = vpop.permute.xlu0 %116
    %118 = vrot.lane.b32.xlu0 %v79, 1
    %v119 = vpop.permute.xlu0 %118
    %v120 = vlaneseq
    %v121 = vand.u32 %v120, 127
    %vm122 = vcmp.lt.s32.totalorder %v121, 1
    %v123 = vsel %vm122, %v117, %v119
    %v124 = vsel %vm122, %v115, %v117
    %v125 = vsel %vm122, %v113, %v115
    %v126 = vsel %vm122, %v119, %v113
    %127 = vrot.lane.b32.xlu0 %v76, 127
    %v128 = vpop.permute.xlu0 %127
    %129 = vrot.lane.b32.xlu0 %v77, 127
    %v130 = vpop.permute.xlu0 %129
    %131 = vrot.lane.b32.xlu0 %v78, 127
    %v132 = vpop.permute.xlu0 %131
    %133 = vrot.lane.b32.xlu0 %v79, 127
    %v134 = vpop.permute.xlu0 %133
    %vm135 = vcmp.lt.s32.totalorder %v121, 127
    %v136 = vsel %vm135, %v132, %v134
    %v137 = vsel %vm135, %v130, %v132
    %v138 = vsel %vm135, %v128, %v130
    %v139 = vsel %vm135, %v134, %v128
    %140 = vrot.lane.b32.xlu0 %v76, 2
    %v141 = vpop.permute.xlu0 %140
    %142 = vrot.lane.b32.xlu0 %v77, 2
    %v143 = vpop.permute.xlu0 %142
    %144 = vrot.lane.b32.xlu0 %v78, 2
    %v145 = vpop.permute.xlu0 %144
    %146 = vrot.lane.b32.xlu0 %v79, 2
    %v147 = vpop.permute.xlu0 %146
    %vm148 = vcmp.lt.s32.totalorder %v121, 2
    %v149 = vsel %vm148, %v145, %v147
    %v150 = vsel %vm148, %v143, %v145
    %v151 = vsel %vm148, %v141, %v143
    %v152 = vsel %vm148, %v147, %v141
    %153 = vrot.lane.b32.xlu0 %v76, 126
    %v154 = vpop.permute.xlu0 %153
    %155 = vrot.lane.b32.xlu0 %v77, 126
    %v156 = vpop.permute.xlu0 %155
    %157 = vrot.lane.b32.xlu0 %v78, 126
    %v158 = vpop.permute.xlu0 %157
    %159 = vrot.lane.b32.xlu0 %v79, 126
    %v160 = vpop.permute.xlu0 %159
    %vm161 = vcmp.lt.s32.totalorder %v121, 126
    %v162 = vsel %vm161, %v158, %v160
    %v163 = vsel %vm161, %v156, %v158
    %v164 = vsel %vm161, %v154, %v156
    %v165 = vsel %vm161, %v160, %v154
    %166 = vrot.lane.b32.xlu0 %v76, 20
    %v167 = vpop.permute.xlu0 %166
    %168 = vrot.lane.b32.xlu0 %v77, 20
    %v169 = vpop.permute.xlu0 %168
    %170 = vrot.lane.b32.xlu0 %v78, 20
    %v171 = vpop.permute.xlu0 %170
    %172 = vrot.lane.b32.xlu0 %v79, 20
    %v173 = vpop.permute.xlu0 %172
    %vm174 = vcmp.lt.s32.totalorder %v121, 20
    %v175 = vsel %vm174, %v171, %v173
    %v176 = vsel %vm174, %v169, %v171
    %v177 = vsel %vm174, %v167, %v169
    %v178 = vsel %vm174, %v173, %v167
    %179 = vrot.lane.b32.xlu0 %v76, 108
    %v180 = vpop.permute.xlu0 %179
    %181 = vrot.lane.b32.xlu0 %v77, 108
    %v182 = vpop.permute.xlu0 %181
    %183 = vrot.lane.b32.xlu0 %v78, 108
    %v184 = vpop.permute.xlu0 %183
    %185 = vrot.lane.b32.xlu0 %v79, 108
    %v186 = vpop.permute.xlu0 %185
    %vm187 = vcmp.lt.s32.totalorder %v121, 108
    %v188 = vsel %vm187, %v184, %v186
    %v189 = vsel %vm187, %v182, %v184
    %v190 = vsel %vm187, %v180, %v182
    %v191 = vsel %vm187, %v186, %v180
    %192 = vrot.lane.b32.xlu0 %v76, 40
    %v193 = vpop.permute.xlu0 %192
    %194 = vrot.lane.b32.xlu0 %v77, 40
    %v195 = vpop.permute.xlu0 %194
    %196 = vrot.lane.b32.xlu0 %v78, 40
    %v197 = vpop.permute.xlu0 %196
    %198 = vrot.lane.b32.xlu0 %v79, 40
    %v199 = vpop.permute.xlu0 %198
    %vm200 = vcmp.lt.s32.totalorder %v121, 40
    %v201 = vsel %vm200, %v197, %v199
    %v202 = vsel %vm200, %v195, %v197
    %v203 = vsel %vm200, %v193, %v195
    %v204 = vsel %vm200, %v199, %v193
    %205 = vrot.lane.b32.xlu0 %v76, 88
    %v206 = vpop.permute.xlu0 %205
    %207 = vrot.lane.b32.xlu0 %v77, 88
    %v208 = vpop.permute.xlu0 %207
    %209 = vrot.lane.b32.xlu0 %v78, 88
    %v210 = vpop.permute.xlu0 %209
    %211 = vrot.lane.b32.xlu0 %v79, 88
    %v212 = vpop.permute.xlu0 %211
    %vm213 = vcmp.lt.s32.totalorder %v121, 88
    %v214 = vsel %vm213, %v210, %v212
    %v215 = vsel %vm213, %v208, %v210
    %v216 = vsel %vm213, %v206, %v208
    %v217 = vsel %vm213, %v212, %v206
    %v218 = vmul.f32 %v126, 0.27406862
    %v219 = vmul.f32 %v125, 0.27406862
    %v220 = vmul.f32 %v124, 0.27406862
    %v221 = vmul.f32 %v123, 0.27406862
    %v222 = vmul.f32 %v76, 0.45186275
    %v223 = vmul.f32 %v77, 0.45186275
    %v224 = vmul.f32 %v78, 0.45186275
    %v225 = vmul.f32 %v79, 0.45186275
    %v226 = vadd.f32 %v218, %v222
    %v227 = vadd.f32 %v219, %v223
    %v228 = vadd.f32 %v220, %v224
    %v229 = vadd.f32 %v221, %v225
    %v230 = vmul.f32 %v138, 0.27406862
    %v231 = vmul.f32 %v137, 0.27406862
    %v232 = vmul.f32 %v136, 0.27406862
    %v233 = vmul.f32 %v139, 0.27406862
    %v234 = vadd.f32 %v226, %v230
    %v235 = vadd.f32 %v227, %v231
    %v236 = vadd.f32 %v228, %v232
    %v237 = vadd.f32 %v229, %v233
    %v238 = vmul.f32 %v178, 0.27406862
    %v239 = vmul.f32 %v177, 0.27406862
    %v240 = vmul.f32 %v176, 0.27406862
    %v241 = vmul.f32 %v175, 0.27406862
    %v242 = vadd.f32 %v238, %v222
    %v243 = vadd.f32 %v239, %v223
    %v244 = vadd.f32 %v240, %v224
    %v245 = vadd.f32 %v241, %v225
    %v246 = vmul.f32 %v190, 0.27406862
    %v247 = vmul.f32 %v189, 0.27406862
    %v248 = vmul.f32 %v188, 0.27406862
    %v249 = vmul.f32 %v191, 0.27406862
    %v250 = vadd.f32 %v242, %v246
    %v251 = vadd.f32 %v243, %v247
    %v252 = vadd.f32 %v244, %v248
    %v253 = vadd.f32 %v245, %v249
    %v254 = vmul.f32 %v152, 0.13357471
    %v255 = vmul.f32 %v151, 0.13357471
    %v256 = vmul.f32 %v150, 0.13357471
    %v257 = vmul.f32 %v149, 0.13357471
    %v258 = vmul.f32 %v126, 0.22921513
    %v259 = vmul.f32 %v125, 0.22921513
    %v260 = vmul.f32 %v124, 0.22921513
    %v261 = vmul.f32 %v123, 0.22921513
    %v262 = vadd.f32 %v254, %v258
    %v263 = vadd.f32 %v255, %v259
    %v264 = vadd.f32 %v256, %v260
    %v265 = vadd.f32 %v257, %v261
    %v266 = vmul.f32 %v76, 0.27442032
    %v267 = vmul.f32 %v77, 0.27442032
    %v268 = vmul.f32 %v78, 0.27442032
    %v269 = vmul.f32 %v79, 0.27442032
    %v270 = vadd.f32 %v262, %v266
    %v271 = vadd.f32 %v263, %v267
    %v272 = vadd.f32 %v264, %v268
    %v273 = vadd.f32 %v265, %v269
    %v274 = vmul.f32 %v138, 0.22921513
    %v275 = vmul.f32 %v137, 0.22921513
    %v276 = vmul.f32 %v136, 0.22921513
    %v277 = vmul.f32 %v139, 0.22921513
    %v278 = vadd.f32 %v270, %v274
    %v279 = vadd.f32 %v271, %v275
    %v280 = vadd.f32 %v272, %v276
    %v281 = vadd.f32 %v273, %v277
    %v282 = vmul.f32 %v164, 0.13357471
    %v283 = vmul.f32 %v163, 0.13357471
    %v284 = vmul.f32 %v162, 0.13357471
    %v285 = vmul.f32 %v165, 0.13357471
    %v286 = vadd.f32 %v278, %v282
    %v287 = vadd.f32 %v279, %v283
    %v288 = vadd.f32 %v280, %v284
    %v289 = vadd.f32 %v281, %v285
    %v290 = vmul.f32 %v204, 0.13357471
    %v291 = vmul.f32 %v203, 0.13357471
    %v292 = vmul.f32 %v202, 0.13357471
    %v293 = vmul.f32 %v201, 0.13357471
    %v294 = vmul.f32 %v178, 0.22921513
    %v295 = vmul.f32 %v177, 0.22921513
    %v296 = vmul.f32 %v176, 0.22921513
    %v297 = vmul.f32 %v175, 0.22921513
    %v298 = vadd.f32 %v290, %v294
    %v299 = vadd.f32 %v291, %v295
    %v300 = vadd.f32 %v292, %v296
    %v301 = vadd.f32 %v293, %v297
    %v302 = vadd.f32 %v298, %v266
    %v303 = vadd.f32 %v299, %v267
    %v304 = vadd.f32 %v300, %v268
    %v305 = vadd.f32 %v301, %v269
    %v306 = vmul.f32 %v190, 0.22921513
    %v307 = vmul.f32 %v189, 0.22921513
    %v308 = vmul.f32 %v188, 0.22921513
    %v309 = vmul.f32 %v191, 0.22921513
    %v310 = vadd.f32 %v302, %v306
    %v311 = vadd.f32 %v303, %v307
    %v312 = vadd.f32 %v304, %v308
    %v313 = vadd.f32 %v305, %v309
    %v314 = vmul.f32 %v216, 0.13357471
    %v315 = vmul.f32 %v215, 0.13357471
    %v316 = vmul.f32 %v214, 0.13357471
    %v317 = vmul.f32 %v217, 0.13357471
    %v318 = vadd.f32 %v310, %v314
    %v319 = vadd.f32 %v311, %v315
    %v320 = vadd.f32 %v312, %v316
    %v321 = vadd.f32 %v313, %v317
    %322 = vrot.lane.b32.xlu0 %v234, 108
    %v323 = vpop.permute.xlu0 %322
    %324 = vrot.lane.b32.xlu0 %v235, 108
    %v325 = vpop.permute.xlu0 %324
    %326 = vrot.lane.b32.xlu0 %v236, 108
    %v327 = vpop.permute.xlu0 %326
    %328 = vrot.lane.b32.xlu0 %v237, 108
    %v329 = vpop.permute.xlu0 %328
    %v330 = vsel %vm187, %v327, %v329
    %v331 = vsel %vm187, %v325, %v327
    %v332 = vsel %vm187, %v323, %v325
    %v333 = vsel %vm187, %v329, %v323
    %334 = vrot.lane.b32.xlu0 %v234, 20
    %v335 = vpop.permute.xlu0 %334
    %336 = vrot.lane.b32.xlu0 %v235, 20
    %v337 = vpop.permute.xlu0 %336
    %338 = vrot.lane.b32.xlu0 %v236, 20
    %v339 = vpop.permute.xlu0 %338
    %340 = vrot.lane.b32.xlu0 %v237, 20
    %v341 = vpop.permute.xlu0 %340
    %v342 = vsel %vm174, %v339, %v341
    %v343 = vsel %vm174, %v337, %v339
    %v344 = vsel %vm174, %v335, %v337
    %v345 = vsel %vm174, %v341, %v335
    %v346 = vsub.f32 %v332, %v345
    %v347 = vsub.f32 %v331, %v344
    %v348 = vsub.f32 %v330, %v343
    %v349 = vsub.f32 %v333, %v342
    %350 = vrot.lane.b32.xlu0 %v250, 127
    %v351 = vpop.permute.xlu0 %350
    %352 = vrot.lane.b32.xlu0 %v251, 127
    %v353 = vpop.permute.xlu0 %352
    %354 = vrot.lane.b32.xlu0 %v252, 127
    %v355 = vpop.permute.xlu0 %354
    %356 = vrot.lane.b32.xlu0 %v253, 127
    %v357 = vpop.permute.xlu0 %356
    %v358 = vsel %vm135, %v355, %v357
    %v359 = vsel %vm135, %v353, %v355
    %v360 = vsel %vm135, %v351, %v353
    %v361 = vsel %vm135, %v357, %v351
    %362 = vrot.lane.b32.xlu0 %v250, 1
    %v363 = vpop.permute.xlu0 %362
    %364 = vrot.lane.b32.xlu0 %v251, 1
    %v365 = vpop.permute.xlu0 %364
    %366 = vrot.lane.b32.xlu0 %v252, 1
    %v367 = vpop.permute.xlu0 %366
    %368 = vrot.lane.b32.xlu0 %v253, 1
    %v369 = vpop.permute.xlu0 %368
    %v370 = vsel %vm122, %v367, %v369
    %v371 = vsel %vm122, %v365, %v367
    %v372 = vsel %vm122, %v363, %v365
    %v373 = vsel %vm122, %v369, %v363
    %v374 = vsub.f32 %v360, %v373
    %v375 = vsub.f32 %v359, %v372
    %v376 = vsub.f32 %v358, %v371
    %v377 = vsub.f32 %v361, %v370
    %378 = vrot.lane.b32.xlu0 %v286, 40
    %v379 = vpop.permute.xlu0 %378
    %380 = vrot.lane.b32.xlu0 %v287, 40
    %v381 = vpop.permute.xlu0 %380
    %382 = vrot.lane.b32.xlu0 %v288, 40
    %v383 = vpop.permute.xlu0 %382
    %384 = vrot.lane.b32.xlu0 %v289, 40
    %v385 = vpop.permute.xlu0 %384
    %v386 = vsel %vm200, %v383, %v385
    %v387 = vsel %vm200, %v381, %v383
    %v388 = vsel %vm200, %v379, %v381
    %v389 = vsel %vm200, %v385, %v379
    %v390 = vmul.f32 %v389, -1.0
    %v391 = vmul.f32 %v388, -1.0
    %v392 = vmul.f32 %v387, -1.0
    %v393 = vmul.f32 %v386, -1.0
    %394 = vrot.lane.b32.xlu0 %v286, 20
    %v395 = vpop.permute.xlu0 %394
    %396 = vrot.lane.b32.xlu0 %v287, 20
    %v397 = vpop.permute.xlu0 %396
    %398 = vrot.lane.b32.xlu0 %v288, 20
    %v399 = vpop.permute.xlu0 %398
    %400 = vrot.lane.b32.xlu0 %v289, 20
    %v401 = vpop.permute.xlu0 %400
    %v402 = vsel %vm174, %v399, %v401
    %v403 = vsel %vm174, %v397, %v399
    %v404 = vsel %vm174, %v395, %v397
    %v405 = vsel %vm174, %v401, %v395
    %v406 = vmul.f32 %v405, -0.5
    %v407 = vmul.f32 %v404, -0.5
    %v408 = vmul.f32 %v403, -0.5
    %v409 = vmul.f32 %v402, -0.5
    %v410 = vadd.f32 %v390, %v406
    %v411 = vadd.f32 %v391, %v407
    %v412 = vadd.f32 %v392, %v408
    %v413 = vadd.f32 %v393, %v409
    %414 = vrot.lane.b32.xlu0 %v286, 108
    %v415 = vpop.permute.xlu0 %414
    %416 = vrot.lane.b32.xlu0 %v287, 108
    %v417 = vpop.permute.xlu0 %416
    %418 = vrot.lane.b32.xlu0 %v288, 108
    %v419 = vpop.permute.xlu0 %418
    %420 = vrot.lane.b32.xlu0 %v289, 108
    %v421 = vpop.permute.xlu0 %420
    %v422 = vsel %vm187, %v419, %v421
    %v423 = vsel %vm187, %v417, %v419
    %v424 = vsel %vm187, %v415, %v417
    %v425 = vsel %vm187, %v421, %v415
    %v426 = vmul.f32 %v424, 0.5
    %v427 = vmul.f32 %v423, 0.5
    %v428 = vmul.f32 %v422, 0.5
    %v429 = vmul.f32 %v425, 0.5
    %v430 = vadd.f32 %v410, %v426
    %v431 = vadd.f32 %v411, %v427
    %v432 = vadd.f32 %v412, %v428
    %v433 = vadd.f32 %v413, %v429
    %434 = vrot.lane.b32.xlu0 %v286, 88
    %v435 = vpop.permute.xlu0 %434
    %436 = vrot.lane.b32.xlu0 %v287, 88
    %v437 = vpop.permute.xlu0 %436
    %438 = vrot.lane.b32.xlu0 %v288, 88
    %v439 = vpop.permute.xlu0 %438
    %440 = vrot.lane.b32.xlu0 %v289, 88
    %v441 = vpop.permute.xlu0 %440
    %v442 = vsel %vm213, %v439, %v441
    %v443 = vsel %vm213, %v437, %v439
    %v444 = vsel %vm213, %v435, %v437
    %v445 = vsel %vm213, %v441, %v435
    %v446 = vadd.f32 %v430, %v444
    %v447 = vadd.f32 %v431, %v443
    %v448 = vadd.f32 %v432, %v442
    %v449 = vadd.f32 %v433, %v445
    %450 = vrot.lane.b32.xlu0 %v318, 2
    %v451 = vpop.permute.xlu0 %450
    %452 = vrot.lane.b32.xlu0 %v319, 2
    %v453 = vpop.permute.xlu0 %452
    %454 = vrot.lane.b32.xlu0 %v320, 2
    %v455 = vpop.permute.xlu0 %454
    %456 = vrot.lane.b32.xlu0 %v321, 2
    %v457 = vpop.permute.xlu0 %456
    %v458 = vsel %vm148, %v455, %v457
    %v459 = vsel %vm148, %v453, %v455
    %v460 = vsel %vm148, %v451, %v453
    %v461 = vsel %vm148, %v457, %v451
    %v462 = vmul.f32 %v461, -1.0
    %v463 = vmul.f32 %v460, -1.0
    %v464 = vmul.f32 %v459, -1.0
    %v465 = vmul.f32 %v458, -1.0
    %466 = vrot.lane.b32.xlu0 %v318, 1
    %v467 = vpop.permute.xlu0 %466
    %468 = vrot.lane.b32.xlu0 %v319, 1
    %v469 = vpop.permute.xlu0 %468
    %470 = vrot.lane.b32.xlu0 %v320, 1
    %v471 = vpop.permute.xlu0 %470
    %472 = vrot.lane.b32.xlu0 %v321, 1
    %v473 = vpop.permute.xlu0 %472
    %v474 = vsel %vm122, %v471, %v473
    %v475 = vsel %vm122, %v469, %v471
    %v476 = vsel %vm122, %v467, %v469
    %v477 = vsel %vm122, %v473, %v467
    %v478 = vmul.f32 %v477, -0.5
    %v479 = vmul.f32 %v476, -0.5
    %v480 = vmul.f32 %v475, -0.5
    %v481 = vmul.f32 %v474, -0.5
    %v482 = vadd.f32 %v462, %v478
    %v483 = vadd.f32 %v463, %v479
    %v484 = vadd.f32 %v464, %v480
    %v485 = vadd.f32 %v465, %v481
    %486 = vrot.lane.b32.xlu0 %v318, 127
    %v487 = vpop.permute.xlu0 %486
    %488 = vrot.lane.b32.xlu0 %v319, 127
    %v489 = vpop.permute.xlu0 %488
    %490 = vrot.lane.b32.xlu0 %v320, 127
    %v491 = vpop.permute.xlu0 %490
    %492 = vrot.lane.b32.xlu0 %v321, 127
    %v493 = vpop.permute.xlu0 %492
    %v494 = vsel %vm135, %v491, %v493
    %v495 = vsel %vm135, %v489, %v491
    %v496 = vsel %vm135, %v487, %v489
    %v497 = vsel %vm135, %v493, %v487
    %v498 = vmul.f32 %v496, 0.5
    %v499 = vmul.f32 %v495, 0.5
    %v500 = vmul.f32 %v494, 0.5
    %v501 = vmul.f32 %v497, 0.5
    %v502 = vadd.f32 %v482, %v498
    %v503 = vadd.f32 %v483, %v499
    %v504 = vadd.f32 %v484, %v500
    %v505 = vadd.f32 %v485, %v501
    %506 = vrot.lane.b32.xlu0 %v318, 126
    %v507 = vpop.permute.xlu0 %506
    %508 = vrot.lane.b32.xlu0 %v319, 126
    %v509 = vpop.permute.xlu0 %508
    %510 = vrot.lane.b32.xlu0 %v320, 126
    %v511 = vpop.permute.xlu0 %510
    %512 = vrot.lane.b32.xlu0 %v321, 126
    %v513 = vpop.permute.xlu0 %512
    %v514 = vsel %vm161, %v511, %v513
    %v515 = vsel %vm161, %v509, %v511
    %v516 = vsel %vm161, %v507, %v509
    %v517 = vsel %vm161, %v513, %v507
    %v518 = vadd.f32 %v502, %v516
    %v519 = vadd.f32 %v503, %v515
    %v520 = vadd.f32 %v504, %v514
    %v521 = vadd.f32 %v505, %v517
    %v522 = vmul.f32 %v346, %v346
    %v523 = vmul.f32 %v347, %v347
    %v524 = vmul.f32 %v348, %v348
    %v525 = vmul.f32 %v349, %v349
    %v526 = vmul.f32 %v374, %v374
    %v527 = vmul.f32 %v375, %v375
    %v528 = vmul.f32 %v376, %v376
    %v529 = vmul.f32 %v377, %v377
    %v530 = vadd.f32 %v522, %v526
    %v531 = vadd.f32 %v523, %v527
    %v532 = vadd.f32 %v524, %v528
    %v533 = vadd.f32 %v525, %v529
    %v534 = vadd.f32 %v530, 1e-08
    %v535 = vadd.f32 %v531, 1e-08
    %v536 = vadd.f32 %v532, 1e-08
    %v537 = vadd.f32 %v533, 1e-08
    %v538 = vrsqrt.pop %v534
    %v539 = vmul.f32 %v538, %v534
    %v540 = vmul.f32 %v539, %v538
    %v541 = vmul.f32 0.5, %v540
    %v542 = vsub.f32 1.5, %v541
    %v543 = vmul.f32 %v538, %v542
    %v544 = vmul.f32 %v534, %v543
    %vm545 = vcmp.eq.f32.partialorder %v534, inf
    %v546 = vsel %vm545, %v534, %v544
    %vm547 = vcmp.eq.f32.partialorder %v534, 0.0
    %v548 = vand.u32 %v534, 2147483648
    %v549 = vsel %vm547, %v548, %v546
    %v550 = vrsqrt.pop %v535
    %v551 = vmul.f32 %v550, %v535
    %v552 = vmul.f32 %v551, %v550
    %v553 = vmul.f32 0.5, %v552
    %v554 = vsub.f32 1.5, %v553
    %v555 = vmul.f32 %v550, %v554
    %v556 = vmul.f32 %v535, %v555
    %vm557 = vcmp.eq.f32.partialorder %v535, inf
    %v558 = vsel %vm557, %v535, %v556
    %vm559 = vcmp.eq.f32.partialorder %v535, 0.0
    %v560 = vand.u32 %v535, 2147483648
    %v561 = vsel %vm559, %v560, %v558
    %v562 = vrsqrt.pop %v536
    %v563 = vmul.f32 %v562, %v536
    %v564 = vmul.f32 %v563, %v562
    %v565 = vmul.f32 0.5, %v564
    %v566 = vsub.f32 1.5, %v565
    %v567 = vmul.f32 %v562, %v566
    %v568 = vmul.f32 %v536, %v567
    %vm569 = vcmp.eq.f32.partialorder %v536, inf
    %v570 = vsel %vm569, %v536, %v568
    %vm571 = vcmp.eq.f32.partialorder %v536, 0.0
    %v572 = vand.u32 %v536, 2147483648
    %v573 = vsel %vm571, %v572, %v570
    %v574 = vrsqrt.pop %v537
    %v575 = vmul.f32 %v574, %v537
    %v576 = vmul.f32 %v575, %v574
    %v577 = vmul.f32 0.5, %v576
    %v578 = vsub.f32 1.5, %v577
    %v579 = vmul.f32 %v574, %v578
    %v580 = vmul.f32 %v537, %v579
    %vm581 = vcmp.eq.f32.partialorder %v537, inf
    %v582 = vsel %vm581, %v537, %v580
    %vm583 = vcmp.eq.f32.partialorder %v537, 0.0
    %v584 = vand.u32 %v537, 2147483648
    %v585 = vsel %vm583, %v584, %v582
    %v586 = vmul.f32 %v446, %v446
    %v587 = vmul.f32 %v447, %v447
    %v588 = vmul.f32 %v448, %v448
    %v589 = vmul.f32 %v449, %v449
    %v590 = vmul.f32 %v518, %v518
    %v591 = vmul.f32 %v519, %v519
    %v592 = vmul.f32 %v520, %v520
    %v593 = vmul.f32 %v521, %v521
    %v594 = vadd.f32 %v586, %v590
    %v595 = vadd.f32 %v587, %v591
    %v596 = vadd.f32 %v588, %v592
    %v597 = vadd.f32 %v589, %v593
    %v598 = vadd.f32 %v594, 1e-08
    %v599 = vadd.f32 %v595, 1e-08
    %v600 = vadd.f32 %v596, 1e-08
    %v601 = vadd.f32 %v597, 1e-08
    %v602 = vrsqrt.pop %v598
    %v603 = vmul.f32 %v602, %v598
    %v604 = vmul.f32 %v603, %v602
    %v605 = vmul.f32 0.5, %v604
    %v606 = vsub.f32 1.5, %v605
    %v607 = vmul.f32 %v602, %v606
    %v608 = vmul.f32 %v598, %v607
    %vm609 = vcmp.eq.f32.partialorder %v598, inf
    %v610 = vsel %vm609, %v598, %v608
    %vm611 = vcmp.eq.f32.partialorder %v598, 0.0
    %v612 = vand.u32 %v598, 2147483648
    %v613 = vsel %vm611, %v612, %v610
    %v614 = vrsqrt.pop %v599
    %v615 = vmul.f32 %v614, %v599
    %v616 = vmul.f32 %v615, %v614
    %v617 = vmul.f32 0.5, %v616
    %v618 = vsub.f32 1.5, %v617
    %v619 = vmul.f32 %v614, %v618
    %v620 = vmul.f32 %v599, %v619
    %vm621 = vcmp.eq.f32.partialorder %v599, inf
    %v622 = vsel %vm621, %v599, %v620
    %vm623 = vcmp.eq.f32.partialorder %v599, 0.0
    %v624 = vand.u32 %v599, 2147483648
    %v625 = vsel %vm623, %v624, %v622
    %v626 = vrsqrt.pop %v600
    %v627 = vmul.f32 %v626, %v600
    %v628 = vmul.f32 %v627, %v626
    %v629 = vmul.f32 0.5, %v628
    %v630 = vsub.f32 1.5, %v629
    %v631 = vmul.f32 %v626, %v630
    %v632 = vmul.f32 %v600, %v631
    %vm633 = vcmp.eq.f32.partialorder %v600, inf
    %v634 = vsel %vm633, %v600, %v632
    %vm635 = vcmp.eq.f32.partialorder %v600, 0.0
    %v636 = vand.u32 %v600, 2147483648
    %v637 = vsel %vm635, %v636, %v634
    %v638 = vrsqrt.pop %v601
    %v639 = vmul.f32 %v638, %v601
    %v640 = vmul.f32 %v639, %v638
    %v641 = vmul.f32 0.5, %v640
    %v642 = vsub.f32 1.5, %v641
    %v643 = vmul.f32 %v638, %v642
    %v644 = vmul.f32 %v601, %v643
    %vm645 = vcmp.eq.f32.partialorder %v601, inf
    %v646 = vsel %vm645, %v601, %v644
    %vm647 = vcmp.eq.f32.partialorder %v601, 0.0
    %v648 = vand.u32 %v601, 2147483648
    %v649 = vsel %vm647, %v648, %v646
    %v650 = vmul.f32 %v613, 0.5
    %v651 = vmul.f32 %v625, 0.5
    %v652 = vmul.f32 %v637, 0.5
    %v653 = vmul.f32 %v649, 0.5
    %v654 = vadd.f32 %v549, %v650
    %v655 = vadd.f32 %v561, %v651
    %v656 = vadd.f32 %v573, %v652
    %v657 = vadd.f32 %v585, %v653
    %v658 = vsub.f32 %v654, 0.1
    %v659 = vsub.f32 %v655, 0.1
    %v660 = vsub.f32 %v656, 0.1
    %v661 = vsub.f32 %v657, 0.1
    %v662 = vmul.f32 %v658, 5.0
    %v663 = vmul.f32 %v659, 5.0
    %v664 = vmul.f32 %v660, 5.0
    %v665 = vmul.f32 %v661, 5.0
    %v666 = vxor.u32 %v662, 2147483648
    %v667 = vxor.u32 %v663, 2147483648
    %v668 = vxor.u32 %v664, 2147483648
    %v669 = vxor.u32 %v665, 2147483648
    %v670 = vmul.f32 %v666, 1.442695
    %v671 = vpow.pop %v670
    %v672 = vmul.f32 %v667, 1.442695
    %v673 = vpow.pop %v672
    %v674 = vmul.f32 %v668, 1.442695
    %v675 = vpow.pop %v674
    %v676 = vmul.f32 %v669, 1.442695
    %v677 = vpow.pop %v676
    %v678 = vadd.f32 %v671, 1.0
    %v679 = vadd.f32 %v673, 1.0
    %v680 = vadd.f32 %v675, 1.0
    %v681 = vadd.f32 %v677, 1.0
    %v682 = vrcp.pop %v678
    %v683 = vmul.f32 %v678, %v682
    %v684 = vsub.f32 1.0, %v683
    %v685 = vmul.f32 %v682, %v684
    %v686 = vadd.f32 %v682, %v685
    %vm687 = vweird.f32 %v678
    %vm688 = vweird.f32 %v682
    %vm689 = vmor %vm687, %vm688
    %v690 = vsel %vm689, %v682, %v686
    %v691 = vand.u32 2147483647, %v678
    %vm692 = vcmp.eq.f32.partialorder %v691, 8.507059e+37
    %v693 = vand.u32 %v678, 2147483648
    %v694 = vor.u32 1.1754944e-38, %v693
    %v695 = vsel %vm692, %v694, %v690
    %v696 = vmul.f32 1.0, %v695
    %v697 = vrcp.pop %v679
    %v698 = vmul.f32 %v679, %v697
    %v699 = vsub.f32 1.0, %v698
    %v700 = vmul.f32 %v697, %v699
    %v701 = vadd.f32 %v697, %v700
    %vm702 = vweird.f32 %v679
    %vm703 = vweird.f32 %v697
    %vm704 = vmor %vm702, %vm703
    %v705 = vsel %vm704, %v697, %v701
    %v706 = vand.u32 2147483647, %v679
    %vm707 = vcmp.eq.f32.partialorder %v706, 8.507059e+37
    %v708 = vand.u32 %v679, 2147483648
    %v709 = vor.u32 1.1754944e-38, %v708
    %v710 = vsel %vm707, %v709, %v705
    %v711 = vmul.f32 1.0, %v710
    %v712 = vrcp.pop %v680
    %v713 = vmul.f32 %v680, %v712
    %v714 = vsub.f32 1.0, %v713
    %v715 = vmul.f32 %v712, %v714
    %v716 = vadd.f32 %v712, %v715
    %vm717 = vweird.f32 %v680
    %vm718 = vweird.f32 %v712
    %vm719 = vmor %vm717, %vm718
    %v720 = vsel %vm719, %v712, %v716
    %v721 = vand.u32 2147483647, %v680
    %vm722 = vcmp.eq.f32.partialorder %v721, 8.507059e+37
    %v723 = vand.u32 %v680, 2147483648
    %v724 = vor.u32 1.1754944e-38, %v723
    %v725 = vsel %vm722, %v724, %v720
    %v726 = vmul.f32 1.0, %v725
    %v727 = vrcp.pop %v681
    %v728 = vmul.f32 %v681, %v727
    %v729 = vsub.f32 1.0, %v728
    %v730 = vmul.f32 %v727, %v729
    %v731 = vadd.f32 %v727, %v730
    %vm732 = vweird.f32 %v681
    %vm733 = vweird.f32 %v727
    %vm734 = vmor %vm732, %vm733
    %v735 = vsel %vm734, %v727, %v731
    %v736 = vand.u32 2147483647, %v681
    %vm737 = vcmp.eq.f32.partialorder %v736, 8.507059e+37
    %v738 = vand.u32 %v681, 2147483648
    %v739 = vor.u32 1.1754944e-38, %v738
    %v740 = vsel %vm737, %v739, %v735
    %v741 = vmul.f32 1.0, %v740
    %v742 = vsel %vm46, 1, 0
    %v743 = vperm.slane %v742, 0
    %v744 = vperm.slane %v742, 1
    %v745 = vperm.slane %v742, 2
    %v746 = vperm.slane %v742, 3
    %vm747 = vcmp.eq.s32.totalorder %v743, 1
    %vm748 = vcmp.eq.s32.totalorder %v744, 1
    %vm749 = vcmp.eq.s32.totalorder %v745, 1
    %vm750 = vcmp.eq.s32.totalorder %v746, 1
    %v751 = vsel %vm747, %v696, -3e+38
    %v752 = vsel %vm748, %v711, -3e+38
    %v753 = vsel %vm749, %v726, -3e+38
    %v754 = vsel %vm750, %v741, -3e+38
    %v755 = vmax.f32 %v751, %v752
    %v756 = vmax.f32 %v753, %v754
    %v757 = vmax.f32 %v755, %v756
    %758 = vmax.xlane.f32.xlu0 %v757
    %v759 = vpop.xlane.xlu0 %758
    %v760 = vsel %vm747, %v696, 3e+38
    %v761 = vsel %vm748, %v711, 3e+38
    %v762 = vsel %vm749, %v726, 3e+38
    %v763 = vsel %vm750, %v741, 3e+38
    %v764 = vmin.f32 %v760, %v761
    %v765 = vmin.f32 %v762, %v763
    %v766 = vmin.f32 %v764, %v765
    %767 = vmin.xlane.f32.xlu0 %v766
    %v768 = vpop.xlane.xlu0 %767
    %v769 = vsub.f32 %v696, %v768
    %v770 = vsub.f32 %v711, %v768
    %v771 = vsub.f32 %v726, %v768
    %v772 = vsub.f32 %v741, %v768
    %v773 = vsub.f32 %v759, %v768
    %v774 = vadd.f32 %v773, 1e-08
    %v775 = vrcp.pop %v774
    %v776 = vmul.f32 %v774, %v775
    %v777 = vsub.f32 1.0, %v776
    %v778 = vmul.f32 %v775, %v777
    %v779 = vadd.f32 %v775, %v778
    %vm780 = vweird.f32 %v774
    %vm781 = vweird.f32 %v775
    %vm782 = vmor %vm780, %vm781
    %v783 = vsel %vm782, %v775, %v779
    %v784 = vand.u32 2147483647, %v774
    %vm785 = vcmp.eq.f32.partialorder %v784, 8.507059e+37
    %v786 = vand.u32 %v774, 2147483648
    %v787 = vor.u32 1.1754944e-38, %v786
    %v788 = vsel %vm785, %v787, %v783
    %v789 = vmul.f32 %v769, %v788
    %v790 = vmul.f32 %v770, %v788
    %v791 = vmul.f32 %v771, %v788
    %v792 = vmul.f32 %v772, %v788
    %794 = vset.pattern.permute.xlu0 0
    %795 = vperm.xlu0 %794, %v47
    %v796 = vpop.permute.xlu0 %795
    %v798 = vmul.f32 %v789, %v796
    %v799 = vmul.f32 %v790, %v796
    %v800 = vmul.f32 %v791, %v796
    %v801 = vmul.f32 %v792, %v796
    %v802 = vadd.f32 %v798, 1.0
    %v803 = vadd.f32 %v799, 1.0
    %v804 = vadd.f32 %v800, 1.0
    %v805 = vadd.f32 %v801, 1.0
    %v806 = vsub.f32 %v48, %v80
    %v807 = vsub.f32 %v49, %v81
    %v808 = vsub.f32 %v50, %v82
    %v809 = vsub.f32 %v51, %v83
    %v810 = vmul.f32 %v806, %v802
    %v811 = vmul.f32 %v807, %v803
    %v812 = vmul.f32 %v808, %v804
    %v813 = vmul.f32 %v809, %v805
    %v814 = vmul.f32 %v810, %v810
    %v815 = vmul.f32 %v811, %v811
    %v816 = vmul.f32 %v812, %v812
    %v817 = vmul.f32 %v813, %v813
    %v818 = vsub.f32 %v56, %v88
    %v819 = vsub.f32 %v57, %v89
    %v820 = vsub.f32 %v58, %v90
    %v821 = vsub.f32 %v59, %v91
    %v822 = vmul.f32 %v818, %v802
    %v823 = vmul.f32 %v819, %v803
    %v824 = vmul.f32 %v820, %v804
    %v825 = vmul.f32 %v821, %v805
    %v826 = vmul.f32 %v822, %v822
    %v827 = vmul.f32 %v823, %v823
    %v828 = vmul.f32 %v824, %v824
    %v829 = vmul.f32 %v825, %v825
    %v830 = vadd.f32 %v814, %v826
    %v831 = vadd.f32 %v815, %v827
    %v832 = vadd.f32 %v816, %v828
    %v833 = vadd.f32 %v817, %v829
    %v834 = vsub.f32 %v68, %v100
    %v835 = vsub.f32 %v69, %v101
    %v836 = vsub.f32 %v70, %v102
    %v837 = vsub.f32 %v71, %v103
    %v838 = vmul.f32 %v834, %v802
    %v839 = vmul.f32 %v835, %v803
    %v840 = vmul.f32 %v836, %v804
    %v841 = vmul.f32 %v837, %v805
    %v842 = vmul.f32 %v838, %v838
    %v843 = vmul.f32 %v839, %v839
    %v844 = vmul.f32 %v840, %v840
    %v845 = vmul.f32 %v841, %v841
    %v846 = vadd.f32 %v830, %v842
    %v847 = vadd.f32 %v831, %v843
    %v848 = vadd.f32 %v832, %v844
    %v849 = vadd.f32 %v833, %v845
    %v850 = vadd.f32 %v846, %v847
    %v851 = vadd.f32 %v850, %v848
    %v852 = vadd.f32 %v851, %v849
    %853 = vadd.xlane.f32.xlu0 %v852
    %v854 = vpop.xlane.xlu0 %853
    %v855 = vmul.f32 %v854, 0.0013020834
    %v856 = vadd.f32 %v178, %v76
    %v857 = vadd.f32 %v177, %v77
    %v858 = vadd.f32 %v176, %v78
    %v859 = vadd.f32 %v175, %v79
    %v860 = vadd.f32 %v856, %v190
    %v861 = vadd.f32 %v857, %v189
    %v862 = vadd.f32 %v858, %v188
    %v863 = vadd.f32 %v859, %v191
    %v864 = vadd.f32 %v126, %v76
    %v865 = vadd.f32 %v125, %v77
    %v866 = vadd.f32 %v124, %v78
    %v867 = vadd.f32 %v123, %v79
    %v868 = vadd.f32 %v864, %v138
    %v869 = vadd.f32 %v865, %v137
    %v870 = vadd.f32 %v866, %v136
    %v871 = vadd.f32 %v867, %v139
    %872 = vrot.lane.b32.xlu0 %v860, 1
    %v873 = vpop.permute.xlu0 %872
    %874 = vrot.lane.b32.xlu0 %v861, 1
    %v875 = vpop.permute.xlu0 %874
    %876 = vrot.lane.b32.xlu0 %v862, 1
    %v877 = vpop.permute.xlu0 %876
    %878 = vrot.lane.b32.xlu0 %v863, 1
    %v879 = vpop.permute.xlu0 %878
    %v880 = vsel %vm122, %v877, %v879
    %v881 = vsel %vm122, %v875, %v877
    %v882 = vsel %vm122, %v873, %v875
    %v883 = vsel %vm122, %v879, %v873
    %v884 = vsub.f32 %v883, %v860
    %v885 = vsub.f32 %v882, %v861
    %v886 = vsub.f32 %v881, %v862
    %v887 = vsub.f32 %v880, %v863
    %888 = vrot.lane.b32.xlu0 %v860, 127
    %v889 = vpop.permute.xlu0 %888
    %890 = vrot.lane.b32.xlu0 %v861, 127
    %v891 = vpop.permute.xlu0 %890
    %892 = vrot.lane.b32.xlu0 %v862, 127
    %v893 = vpop.permute.xlu0 %892
    %894 = vrot.lane.b32.xlu0 %v863, 127
    %v895 = vpop.permute.xlu0 %894
    %v896 = vsel %vm135, %v893, %v895
    %v897 = vsel %vm135, %v891, %v893
    %v898 = vsel %vm135, %v889, %v891
    %v899 = vsel %vm135, %v895, %v889
    %v900 = vsub.f32 %v884, %v898
    %v901 = vsub.f32 %v885, %v897
    %v902 = vsub.f32 %v886, %v896
    %v903 = vsub.f32 %v887, %v899
    %904 = vrot.lane.b32.xlu0 %v868, 20
    %v905 = vpop.permute.xlu0 %904
    %906 = vrot.lane.b32.xlu0 %v869, 20
    %v907 = vpop.permute.xlu0 %906
    %908 = vrot.lane.b32.xlu0 %v870, 20
    %v909 = vpop.permute.xlu0 %908
    %910 = vrot.lane.b32.xlu0 %v871, 20
    %v911 = vpop.permute.xlu0 %910
    %v912 = vsel %vm174, %v909, %v911
    %v913 = vsel %vm174, %v907, %v909
    %v914 = vsel %vm174, %v905, %v907
    %v915 = vsel %vm174, %v911, %v905
    %v916 = vsub.f32 %v915, %v868
    %v917 = vsub.f32 %v914, %v869
    %v918 = vsub.f32 %v913, %v870
    %v919 = vsub.f32 %v912, %v871
    %920 = vrot.lane.b32.xlu0 %v868, 108
    %v921 = vpop.permute.xlu0 %920
    %922 = vrot.lane.b32.xlu0 %v869, 108
    %v923 = vpop.permute.xlu0 %922
    %924 = vrot.lane.b32.xlu0 %v870, 108
    %v925 = vpop.permute.xlu0 %924
    %926 = vrot.lane.b32.xlu0 %v871, 108
    %v927 = vpop.permute.xlu0 %926
    %v928 = vsel %vm187, %v925, %v927
    %v929 = vsel %vm187, %v923, %v925
    %v930 = vsel %vm187, %v921, %v923
    %v931 = vsel %vm187, %v927, %v921
    %v932 = vsub.f32 %v916, %v930
    %v933 = vsub.f32 %v917, %v929
    %v934 = vsub.f32 %v918, %v928
    %v935 = vsub.f32 %v919, %v931
    %v936 = vmul.f32 %v900, %v900
    %v937 = vmul.f32 %v901, %v901
    %v938 = vmul.f32 %v902, %v902
    %v939 = vmul.f32 %v903, %v903
    %v940 = vmul.f32 %v932, %v932
    %v941 = vmul.f32 %v933, %v933
    %v942 = vmul.f32 %v934, %v934
    %v943 = vmul.f32 %v935, %v935
    %v944 = vadd.f32 %v936, %v940
    %v945 = vadd.f32 %v937, %v941
    %v946 = vadd.f32 %v938, %v942
    %v947 = vadd.f32 %v939, %v943
    %v948 = vadd.f32 %v944, 1e-06
    %v949 = vadd.f32 %v945, 1e-06
    %v950 = vadd.f32 %v946, 1e-06
    %v951 = vadd.f32 %v947, 1e-06
    %v952 = vrsqrt.pop %v948
    %v953 = vmul.f32 %v952, %v948
    %v954 = vmul.f32 %v953, %v952
    %v955 = vmul.f32 0.5, %v954
    %v956 = vsub.f32 1.5, %v955
    %v957 = vmul.f32 %v952, %v956
    %v958 = vmul.f32 %v948, %v957
    %vm959 = vcmp.eq.f32.partialorder %v948, inf
    %v960 = vsel %vm959, %v948, %v958
    %vm961 = vcmp.eq.f32.partialorder %v948, 0.0
    %v962 = vand.u32 %v948, 2147483648
    %v963 = vsel %vm961, %v962, %v960
    %v964 = vrsqrt.pop %v949
    %v965 = vmul.f32 %v964, %v949
    %v966 = vmul.f32 %v965, %v964
    %v967 = vmul.f32 0.5, %v966
    %v968 = vsub.f32 1.5, %v967
    %v969 = vmul.f32 %v964, %v968
    %v970 = vmul.f32 %v949, %v969
    %vm971 = vcmp.eq.f32.partialorder %v949, inf
    %v972 = vsel %vm971, %v949, %v970
    %vm973 = vcmp.eq.f32.partialorder %v949, 0.0
    %v974 = vand.u32 %v949, 2147483648
    %v975 = vsel %vm973, %v974, %v972
    %v976 = vrsqrt.pop %v950
    %v977 = vmul.f32 %v976, %v950
    %v978 = vmul.f32 %v977, %v976
    %v979 = vmul.f32 0.5, %v978
    %v980 = vsub.f32 1.5, %v979
    %v981 = vmul.f32 %v976, %v980
    %v982 = vmul.f32 %v950, %v981
    %vm983 = vcmp.eq.f32.partialorder %v950, inf
    %v984 = vsel %vm983, %v950, %v982
    %vm985 = vcmp.eq.f32.partialorder %v950, 0.0
    %v986 = vand.u32 %v950, 2147483648
    %v987 = vsel %vm985, %v986, %v984
    %v988 = vrsqrt.pop %v951
    %v989 = vmul.f32 %v988, %v951
    %v990 = vmul.f32 %v989, %v988
    %v991 = vmul.f32 0.5, %v990
    %v992 = vsub.f32 1.5, %v991
    %v993 = vmul.f32 %v988, %v992
    %v994 = vmul.f32 %v951, %v993
    %vm995 = vcmp.eq.f32.partialorder %v951, inf
    %v996 = vsel %vm995, %v951, %v994
    %vm997 = vcmp.eq.f32.partialorder %v951, 0.0
    %v998 = vand.u32 %v951, 2147483648
    %v999 = vsel %vm997, %v998, %v996
    %1000 = vrot.lane.b32.xlu0 %v108, 1
    %v1001 = vpop.permute.xlu0 %1000
    %1002 = vrot.lane.b32.xlu0 %v109, 1
    %v1003 = vpop.permute.xlu0 %1002
    %1004 = vrot.lane.b32.xlu0 %v110, 1
    %v1005 = vpop.permute.xlu0 %1004
    %1006 = vrot.lane.b32.xlu0 %v111, 1
    %v1007 = vpop.permute.xlu0 %1006
    %v1008 = vsel %vm122, %v1005, %v1007
    %v1009 = vsel %vm122, %v1003, %v1005
    %v1010 = vsel %vm122, %v1001, %v1003
    %v1011 = vsel %vm122, %v1007, %v1001
    %1012 = vrot.lane.b32.xlu0 %v108, 127
    %v1013 = vpop.permute.xlu0 %1012
    %1014 = vrot.lane.b32.xlu0 %v109, 127
    %v1015 = vpop.permute.xlu0 %1014
    %1016 = vrot.lane.b32.xlu0 %v110, 127
    %v1017 = vpop.permute.xlu0 %1016
    %1018 = vrot.lane.b32.xlu0 %v111, 127
    %v1019 = vpop.permute.xlu0 %1018
    %v1020 = vsel %vm135, %v1017, %v1019
    %v1021 = vsel %vm135, %v1015, %v1017
    %v1022 = vsel %vm135, %v1013, %v1015
    %v1023 = vsel %vm135, %v1019, %v1013
    %1024 = vrot.lane.b32.xlu0 %v108, 20
    %v1025 = vpop.permute.xlu0 %1024
    %1026 = vrot.lane.b32.xlu0 %v109, 20
    %v1027 = vpop.permute.xlu0 %1026
    %1028 = vrot.lane.b32.xlu0 %v110, 20
    %v1029 = vpop.permute.xlu0 %1028
    %1030 = vrot.lane.b32.xlu0 %v111, 20
    %v1031 = vpop.permute.xlu0 %1030
    %v1032 = vsel %vm174, %v1029, %v1031
    %v1033 = vsel %vm174, %v1027, %v1029
    %v1034 = vsel %vm174, %v1025, %v1027
    %v1035 = vsel %vm174, %v1031, %v1025
    %1036 = vrot.lane.b32.xlu0 %v108, 108
    %v1037 = vpop.permute.xlu0 %1036
    %1038 = vrot.lane.b32.xlu0 %v109, 108
    %v1039 = vpop.permute.xlu0 %1038
    %1040 = vrot.lane.b32.xlu0 %v110, 108
    %v1041 = vpop.permute.xlu0 %1040
    %1042 = vrot.lane.b32.xlu0 %v111, 108
    %v1043 = vpop.permute.xlu0 %1042
    %v1044 = vsel %vm187, %v1041, %v1043
    %v1045 = vsel %vm187, %v1039, %v1041
    %v1046 = vsel %vm187, %v1037, %v1039
    %v1047 = vsel %vm187, %v1043, %v1037
    %v1048 = vadd.f32 %v1035, %v108
    %v1049 = vadd.f32 %v1034, %v109
    %v1050 = vadd.f32 %v1033, %v110
    %v1051 = vadd.f32 %v1032, %v111
    %v1052 = vadd.f32 %v1048, %v1046
    %v1053 = vadd.f32 %v1049, %v1045
    %v1054 = vadd.f32 %v1050, %v1044
    %v1055 = vadd.f32 %v1051, %v1047
    %v1056 = vadd.f32 %v1011, %v108
    %v1057 = vadd.f32 %v1010, %v109
    %v1058 = vadd.f32 %v1009, %v110
    %v1059 = vadd.f32 %v1008, %v111
    %v1060 = vadd.f32 %v1056, %v1022
    %v1061 = vadd.f32 %v1057, %v1021
    %v1062 = vadd.f32 %v1058, %v1020
    %v1063 = vadd.f32 %v1059, %v1023
    %1064 = vrot.lane.b32.xlu0 %v1052, 1
    %v1065 = vpop.permute.xlu0 %1064
    %1066 = vrot.lane.b32.xlu0 %v1053, 1
    %v1067 = vpop.permute.xlu0 %1066
    %1068 = vrot.lane.b32.xlu0 %v1054, 1
    %v1069 = vpop.permute.xlu0 %1068
    %1070 = vrot.lane.b32.xlu0 %v1055, 1
    %v1071 = vpop.permute.xlu0 %1070
    %v1072 = vsel %vm122, %v1069, %v1071
    %v1073 = vsel %vm122, %v1067, %v1069
    %v1074 = vsel %vm122, %v1065, %v1067
    %v1075 = vsel %vm122, %v1071, %v1065
    %v1076 = vsub.f32 %v1075, %v1052
    %v1077 = vsub.f32 %v1074, %v1053
    %v1078 = vsub.f32 %v1073, %v1054
    %v1079 = vsub.f32 %v1072, %v1055
    %1080 = vrot.lane.b32.xlu0 %v1052, 127
    %v1081 = vpop.permute.xlu0 %1080
    %1082 = vrot.lane.b32.xlu0 %v1053, 127
    %v1083 = vpop.permute.xlu0 %1082
    %1084 = vrot.lane.b32.xlu0 %v1054, 127
    %v1085 = vpop.permute.xlu0 %1084
    %1086 = vrot.lane.b32.xlu0 %v1055, 127
    %v1087 = vpop.permute.xlu0 %1086
    %v1088 = vsel %vm135, %v1085, %v1087
    %v1089 = vsel %vm135, %v1083, %v1085
    %v1090 = vsel %vm135, %v1081, %v1083
    %v1091 = vsel %vm135, %v1087, %v1081
    %v1092 = vsub.f32 %v1076, %v1090
    %v1093 = vsub.f32 %v1077, %v1089
    %v1094 = vsub.f32 %v1078, %v1088
    %v1095 = vsub.f32 %v1079, %v1091
    %1096 = vrot.lane.b32.xlu0 %v1060, 20
    %v1097 = vpop.permute.xlu0 %1096
    %1098 = vrot.lane.b32.xlu0 %v1061, 20
    %v1099 = vpop.permute.xlu0 %1098
    %1100 = vrot.lane.b32.xlu0 %v1062, 20
    %v1101 = vpop.permute.xlu0 %1100
    %1102 = vrot.lane.b32.xlu0 %v1063, 20
    %v1103 = vpop.permute.xlu0 %1102
    %v1104 = vsel %vm174, %v1101, %v1103
    %v1105 = vsel %vm174, %v1099, %v1101
    %v1106 = vsel %vm174, %v1097, %v1099
    %v1107 = vsel %vm174, %v1103, %v1097
    %v1108 = vsub.f32 %v1107, %v1060
    %v1109 = vsub.f32 %v1106, %v1061
    %v1110 = vsub.f32 %v1105, %v1062
    %v1111 = vsub.f32 %v1104, %v1063
    %1112 = vrot.lane.b32.xlu0 %v1060, 108
    %v1113 = vpop.permute.xlu0 %1112
    %1114 = vrot.lane.b32.xlu0 %v1061, 108
    %v1115 = vpop.permute.xlu0 %1114
    %1116 = vrot.lane.b32.xlu0 %v1062, 108
    %v1117 = vpop.permute.xlu0 %1116
    %1118 = vrot.lane.b32.xlu0 %v1063, 108
    %v1119 = vpop.permute.xlu0 %1118
    %v1120 = vsel %vm187, %v1117, %v1119
    %v1121 = vsel %vm187, %v1115, %v1117
    %v1122 = vsel %vm187, %v1113, %v1115
    %v1123 = vsel %vm187, %v1119, %v1113
    %v1124 = vsub.f32 %v1108, %v1122
    %v1125 = vsub.f32 %v1109, %v1121
    %v1126 = vsub.f32 %v1110, %v1120
    %v1127 = vsub.f32 %v1111, %v1123
    %v1128 = vmul.f32 %v1092, %v1092
    %v1129 = vmul.f32 %v1093, %v1093
    %v1130 = vmul.f32 %v1094, %v1094
    %v1131 = vmul.f32 %v1095, %v1095
    %v1132 = vmul.f32 %v1124, %v1124
    %v1133 = vmul.f32 %v1125, %v1125
    %v1134 = vmul.f32 %v1126, %v1126
    %v1135 = vmul.f32 %v1127, %v1127
    %v1136 = vadd.f32 %v1128, %v1132
    %v1137 = vadd.f32 %v1129, %v1133
    %v1138 = vadd.f32 %v1130, %v1134
    %v1139 = vadd.f32 %v1131, %v1135
    %v1140 = vadd.f32 %v1136, 1e-06
    %v1141 = vadd.f32 %v1137, 1e-06
    %v1142 = vadd.f32 %v1138, 1e-06
    %v1143 = vadd.f32 %v1139, 1e-06
    %v1144 = vrsqrt.pop %v1140
    %v1145 = vmul.f32 %v1144, %v1140
    %v1146 = vmul.f32 %v1145, %v1144
    %v1147 = vmul.f32 0.5, %v1146
    %v1148 = vsub.f32 1.5, %v1147
    %v1149 = vmul.f32 %v1144, %v1148
    %v1150 = vmul.f32 %v1140, %v1149
    %vm1151 = vcmp.eq.f32.partialorder %v1140, inf
    %v1152 = vsel %vm1151, %v1140, %v1150
    %vm1153 = vcmp.eq.f32.partialorder %v1140, 0.0
    %v1154 = vand.u32 %v1140, 2147483648
    %v1155 = vsel %vm1153, %v1154, %v1152
    %v1156 = vrsqrt.pop %v1141
    %v1157 = vmul.f32 %v1156, %v1141
    %v1158 = vmul.f32 %v1157, %v1156
    %v1159 = vmul.f32 0.5, %v1158
    %v1160 = vsub.f32 1.5, %v1159
    %v1161 = vmul.f32 %v1156, %v1160
    %v1162 = vmul.f32 %v1141, %v1161
    %vm1163 = vcmp.eq.f32.partialorder %v1141, inf
    %v1164 = vsel %vm1163, %v1141, %v1162
    %vm1165 = vcmp.eq.f32.partialorder %v1141, 0.0
    %v1166 = vand.u32 %v1141, 2147483648
    %v1167 = vsel %vm1165, %v1166, %v1164
    %v1168 = vrsqrt.pop %v1142
    %v1169 = vmul.f32 %v1168, %v1142
    %v1170 = vmul.f32 %v1169, %v1168
    %v1171 = vmul.f32 0.5, %v1170
    %v1172 = vsub.f32 1.5, %v1171
    %v1173 = vmul.f32 %v1168, %v1172
    %v1174 = vmul.f32 %v1142, %v1173
    %vm1175 = vcmp.eq.f32.partialorder %v1142, inf
    %v1176 = vsel %vm1175, %v1142, %v1174
    %vm1177 = vcmp.eq.f32.partialorder %v1142, 0.0
    %v1178 = vand.u32 %v1142, 2147483648
    %v1179 = vsel %vm1177, %v1178, %v1176
    %v1180 = vrsqrt.pop %v1143
    %v1181 = vmul.f32 %v1180, %v1143
    %v1182 = vmul.f32 %v1181, %v1180
    %v1183 = vmul.f32 0.5, %v1182
    %v1184 = vsub.f32 1.5, %v1183
    %v1185 = vmul.f32 %v1180, %v1184
    %v1186 = vmul.f32 %v1143, %v1185
    %vm1187 = vcmp.eq.f32.partialorder %v1143, inf
    %v1188 = vsel %vm1187, %v1143, %v1186
    %vm1189 = vcmp.eq.f32.partialorder %v1143, 0.0
    %v1190 = vand.u32 %v1143, 2147483648
    %v1191 = vsel %vm1189, %v1190, %v1188
    %v1192 = vsub.f32 %v963, %v1155
    %v1193 = vsub.f32 %v975, %v1167
    %v1194 = vsub.f32 %v987, %v1179
    %v1195 = vsub.f32 %v999, %v1191
    %v1196 = vand.u32 2147483647, %v1192
    %v1197 = vand.u32 2147483647, %v1193
    %v1198 = vand.u32 2147483647, %v1194
    %v1199 = vand.u32 2147483647, %v1195
    %vm1200 = vcmp.lt.f32.partialorder %v1196, 0.4
    %vm1201 = vcmp.lt.f32.partialorder %v1197, 0.4
    %vm1202 = vcmp.lt.f32.partialorder %v1198, 0.4
    %vm1203 = vcmp.lt.f32.partialorder %v1199, 0.4
    %v1204 = vmul.f32 %v1192, 0.5
    %v1205 = vmul.f32 %v1193, 0.5
    %v1206 = vmul.f32 %v1194, 0.5
    %v1207 = vmul.f32 %v1195, 0.5
    %v1208 = vmul.f32 %v1204, %v1192
    %v1209 = vmul.f32 %v1205, %v1193
    %v1210 = vmul.f32 %v1206, %v1194
    %v1211 = vmul.f32 %v1207, %v1195
    %v1212 = vmul.f32 %v1208, 2.5
    %v1213 = vmul.f32 %v1209, 2.5
    %v1214 = vmul.f32 %v1210, 2.5
    %v1215 = vmul.f32 %v1211, 2.5
    %v1216 = vsub.f32 %v1196, 0.2
    %v1217 = vsub.f32 %v1197, 0.2
    %v1218 = vsub.f32 %v1198, 0.2
    %v1219 = vsub.f32 %v1199, 0.2
    %v1220 = vsel %vm1200, %v1212, %v1216
    %v1221 = vsel %vm1201, %v1213, %v1217
    %v1222 = vsel %vm1202, %v1214, %v1218
    %v1223 = vsel %vm1203, %v1215, %v1219
    %v1224 = vmul.f32 %v1220, 0.5
    %v1225 = vmul.f32 %v1221, 0.5
    %v1226 = vmul.f32 %v1222, 0.5
    %v1227 = vmul.f32 %v1223, 0.5
    %v1228 = vadd.f32 %v1208, %v1224
    %v1229 = vadd.f32 %v1209, %v1225
    %v1230 = vadd.f32 %v1210, %v1226
    %v1231 = vadd.f32 %v1211, %v1227
    %v1233 = vperm.slane %v45, 0
    %v1234 = vperm.slane %v45, 1
    %v1235 = vperm.slane %v45, 2
    %v1236 = vperm.slane %v45, 3
    %v1241 = vmul.f32 %v1228, %v1233
    %v1242 = vmul.f32 %v1229, %v1234
    %v1243 = vmul.f32 %v1230, %v1235
    %v1244 = vmul.f32 %v1231, %v1236
    %v1245 = vadd.f32 %v1241, %v1242
    %v1246 = vadd.f32 %v1245, %v1243
    %v1247 = vadd.f32 %v1246, %v1244
    %1248 = vadd.xlane.f32.xlu0 %v1247
    %v1249 = vpop.xlane.xlu0 %1248
    %v1250 = vmul.f32 %v1249, 0.00390625
    %v1251 = vmul.f32 %v1250, %v47
    %vm1252 = vcmask 7168
    %1253 = vst.msk [vmem:[%s4] sm:$0xff] %vm1252, %v855
    %1255 = vrot.lane.b32.xlu0 %v1251, 1
    %v1256 = vpop.permute.xlu0 %1255
    %vm1258 = vcmask 15368
    %1259 = vst.msk [vmem:[%s4] sm:$0xff] %vm1258, %v1256
    // Predicated region
    $region26: #{tpu_custom_call.1} parent=1 // pred_check
      _
    $region27: #{tpu_custom_call.1} parent=1 // pred_check_branch
      %1261 = sbr.rel (0) target = $region29
    $region28: #{tpu_custom_call.1} parent=1 // pred_region
      _
    $region29: #{tpu_custom_call.1} parent=1 // pred_fallthru
      _
    // Predicated region
    $region30: #{tpu_custom_call.1} parent=1 // pred_check
      _
    $region31: #{tpu_custom_call.1} parent=1 // pred_check_branch
      %1263 = sbr.rel (0) target = $region33
    $region32: #{tpu_custom_call.1} parent=1 // pred_region
      _
    $region33: #{tpu_custom_call.1} parent=1 // pred_fallthru
      _
    %1264 = vsyncpa [#allocation3], 1
    %1265 = vsyncpa [#allocation5], 1

</llo_original>
